<compile_context>
chip_gen: v7x
topology: tpu7x:2x2x1
jax: 0.10.0
libtpu: 0.0.40
codegen_flags: <defaults>
</compile_context>

<pallas_src>
import functools

import jax
import jax.numpy as jnp
from jax import lax
from jax.experimental import pallas as pl
from jax.experimental.pallas import tpu as pltpu


def _round_up(x, m):
    return (x + m - 1) // m * m


def _conv_bn_silu_kernel(x_ref, w_ref, b_ref, o_ref, acc_ref, *, k, th, wo):
    """One (batch, H-tile) output block per grid step.

    x_ref  : (1, 1, th+k-1, wp_pad, cin_p)  bf16 halo'd input tile
    w_ref  : (k, k*cin_p, cout_p)           bf16 weight, BN scale folded in,
                                            laid out (kw, (kh, cin), cout)
    b_ref  : (1, cout_p)                    f32 folded BN bias
    o_ref  : (1, th, wo, cout_p)            output tile
    acc_ref: (th*wo, cout_p)                f32 VMEM scratch accumulator
    """
    cin_p = x_ref.shape[-1]
    cout_p = o_ref.shape[-1]

    # Static unrolled loop over the k horizontal taps: one sublane-shifted
    # slice per kw; the k vertical taps are cheap outer-dim shifts and are
    # merged into the MXU contraction (depth k*cin_p).
    for kw in range(k):
        slab = x_ref[0, 0, :, kw:kw + wo, :]               # (th+k-1, wo, cin_p)
        cols = [slab[kh:kh + th] for kh in range(k)]       # each (th, wo, cin_p)
        patch = jnp.concatenate(cols, axis=-1)             # (th, wo, k*cin_p)
        patch = patch.reshape(th * wo, k * cin_p)
        contrib = jnp.dot(patch, w_ref[kw],
                          preferred_element_type=jnp.float32)
        if kw == 0:
            acc_ref[...] = contrib
        else:
            acc_ref[...] += contrib

    # Fused BatchNorm bias + SiLU epilogue, kept in f32 (v5e VPU/EUP have no bf16).
    y = acc_ref[...] + b_ref[0][None, :]
    y = y * jax.nn.sigmoid(y)
    o_ref[0] = y.reshape(th, wo, cout_p).astype(o_ref.dtype)


def conv_bn_silu(x_nchw, weight_oihw, gamma, beta, running_mean, running_var,
                 *, k, s=1, g=1, eps=1e-3, compute_dtype=jnp.bfloat16,
                 tile_budget_bytes=8 << 20):
    """Equivalent of Conv(in, out, SiLU, k, s, g).forward(x) in eval mode."""
    assert s == 1 and g == 1 and k % 2 == 1, \
        "kernel implements stride=1, groups=1, odd k"
    N, Cin, H, W = x_nchw.shape
    Cout = weight_oihw.shape[0]
    pad = k // 2
    Ho, Wo = H, W                        # stride 1, 'same'-style padding k//2

    cin_p = _round_up(Cin, 128)          # lane-pad channels
    cout_p = _round_up(Cout, 128)
    wp = Wo + 2 * pad
    wp_pad = _round_up(wp, 8)            # sublane-friendly padded width

    out_dtype = x_nchw.dtype
    in_elt = jnp.dtype(compute_dtype).itemsize
    out_elt = jnp.dtype(out_dtype).itemsize

    # --- pick the H tile: largest divisor of Ho that fits the VMEM budget,
    #     preferring >=2 tiles (2 parallel grid cells for v7x's 2 TCs). ---
    divisors = [d for d in range(1, Ho + 1) if Ho % d == 0]

    def _fits(t):
        xb = (t + k - 1) * wp_pad * cin_p * in_elt
        ob = t * Wo * cout_p * out_elt
        ab = t * Wo * cout_p * 4
        return 2 * (xb + ob) + ab <= tile_budget_bytes

    ok = [d for d in divisors if _fits(d)] or [divisors[0]]
    multi = [d for d in ok if Ho // d >= 2]
    th = max(multi) if multi else max(ok)
    n_t = Ho // th

    # --- glue (plain JAX): layout, padding, halo tiling, BN folding ---
    x_nhwc = jnp.transpose(x_nchw, (0, 2, 3, 1)).astype(compute_dtype)
    x_pad = jnp.pad(
        x_nhwc,
        ((0, 0), (pad, pad), (pad, pad + (wp_pad - wp)), (0, cin_p - Cin)))
    # (N, n_t, th+k-1, wp_pad, cin_p): H tiles carrying a (k-1)-row halo.
    x_tiles = jnp.stack(
        [x_pad[:, t * th: t * th + th + k - 1] for t in range(n_t)], axis=1)

    scale = (gamma / jnp.sqrt(running_var + eps)).astype(jnp.float32)
    bias = (beta - running_mean * scale).astype(jnp.float32)

    w_hwio = jnp.transpose(weight_oihw, (2, 3, 1, 0)).astype(jnp.float32)
    w_fold = w_hwio * scale[None, None, None, :]          # BN scale -> weight
    w_fold = jnp.pad(w_fold,
                     ((0, 0), (0, 0), (0, cin_p - Cin), (0, cout_p - Cout)))
    # (kw, kh*cin_p, cout_p): matches the kernel's in-tile im2col ordering.
    w_kern = jnp.transpose(w_fold, (1, 0, 2, 3)).reshape(
        k, k * cin_p, cout_p).astype(compute_dtype)

    bias_p = jnp.pad(bias, (0, cout_p - Cout)).reshape(1, cout_p)

    kernel = functools.partial(_conv_bn_silu_kernel, k=k, th=th, wo=Wo)

    # Explicit VMEM limit (v7x only has 64 MiB physical).
    x_tile_b = (th + k - 1) * wp_pad * cin_p * in_elt
    o_tile_b = th * Wo * cout_p * out_elt
    w_b = k * k * cin_p * cout_p * in_elt
    est = 2 * (x_tile_b + o_tile_b) + 2 * w_b + th * Wo * cout_p * 4 + (1 << 20)
    vmem_limit = int(min(max(2 * est, 8 << 20), 48 << 20))

    out_nhwc = pl.pallas_call(
        kernel,
        out_shape=jax.ShapeDtypeStruct((N, Ho, Wo, cout_p), out_dtype),
        grid_spec=pltpu.PrefetchScalarGridSpec(
            num_scalar_prefetch=0,
            grid=(N, n_t),
            in_specs=[
                pl.BlockSpec((1, 1, th + k - 1, wp_pad, cin_p),
                             lambda n, t: (n, t, 0, 0, 0)),
                pl.BlockSpec((k, k * cin_p, cout_p), lambda n, t: (0, 0, 0)),
                pl.BlockSpec((1, cout_p), lambda n, t: (0, 0)),
            ],
            out_specs=pl.BlockSpec((1, th, Wo, cout_p),
                                   lambda n, t: (n, t, 0, 0)),
            scratch_shapes=[pltpu.VMEM((th * Wo, cout_p), jnp.float32)],
        ),
        compiler_params=pltpu.CompilerParams(
            dimension_semantics=("parallel", "parallel"),
            vmem_limit_bytes=vmem_limit),
    )(x_tiles, w_kern, bias_p)

    out = out_nhwc[..., :Cout]                             # drop channel pad
    return jnp.transpose(out, (0, 3, 1, 2))                # NHWC -> NCHW


def _reference_f32(x, w, gamma, beta, mean, var, *, k, eps=1e-3):
    """Pure-f32 module reference (semantic sanity check)."""
    pad = k // 2
    y = lax.conv_general_dilated(
        x.astype(jnp.float32), w.astype(jnp.float32),
        window_strides=(1, 1), padding=[(pad, pad), (pad, pad)],
        dimension_numbers=("NCHW", "OIHW", "NCHW"),
        precision=lax.Precision.HIGHEST)
    scale = gamma / jnp.sqrt(var + eps)
    bias = beta - mean * scale
    y = y * scale[None, :, None, None] + bias[None, :, None, None]
    return y * jax.nn.sigmoid(y)


def _reference_bf16_operands(x, w, gamma, beta, mean, var, *, k, eps=1e-3):
    """Same math as the kernel: bf16 conv operands (BN scale folded into the
    weight), f32 accumulation, f32 epilogue — tight correctness check."""
    pad = k // 2
    scale = gamma / jnp.sqrt(var + eps)
    bias = beta - mean * scale
    w_fold = (w.astype(jnp.float32)
              * scale[:, None, None, None]).astype(jnp.bfloat16)
    x_b = x.astype(jnp.bfloat16)
    y = lax.conv_general_dilated(
        x_b.astype(jnp.float32), w_fold.astype(jnp.float32),
        window_strides=(1, 1), padding=[(pad, pad), (pad, pad)],
        dimension_numbers=("NCHW", "OIHW", "NCHW"),
        precision=lax.Precision.HIGHEST)
    y = y + bias[None, :, None, None]
    return y * jax.nn.sigmoid(y)


if __name__ == "__main__":
    key = jax.random.PRNGKey(0)
    k_x, k_w, k_g, k_b, k_m, k_v = jax.random.split(key, 6)

    N, Cin, H, W = 2, 4, 16, 16
    Cout, K = 8, 3

    x = jax.random.normal(k_x, (N, Cin, H, W), dtype=jnp.float32)
    weight = 0.1 * jax.random.normal(k_w, (Cout, Cin, K, K), dtype=jnp.float32)
    gamma = 1.0 + 0.1 * jax.random.normal(k_g, (Cout,), dtype=jnp.float32)
    beta = 0.1 * jax.random.normal(k_b, (Cout,), dtype=jnp.float32)
    running_mean = 0.1 * jax.random.normal(k_m, (Cout,), dtype=jnp.float32)
    running_var = jnp.abs(jax.random.normal(k_v, (Cout,), dtype=jnp.float32)) + 0.5

    out = conv_bn_silu(x, weight, gamma, beta, running_mean, running_var,
                       k=K, s=1, g=1, eps=1e-3)
    out = jax.block_until_ready(out)
    assert out.shape == (N, Cout, H, W)

    # Tight check vs a reference using the exact same bf16 operands.
    ref_q = _reference_bf16_operands(x, weight, gamma, beta, running_mean,
                                     running_var, k=K, eps=1e-3)
    err_q = float(jnp.max(jnp.abs(out - ref_q)))
    assert jnp.allclose(out, ref_q, atol=5e-3, rtol=5e-3), err_q

    # Loose semantic check vs the full-f32 module reference (bf16 quantization).
    ref = _reference_f32(x, weight, gamma, beta, running_mean, running_var,
                         k=K, eps=1e-3)
    err = float(jnp.max(jnp.abs(out - ref)))
    assert jnp.allclose(out, ref, atol=1e-1, rtol=1e-1), err

    print("KERNEL_OK")
</pallas_src>

<mosaic_0001>
module attributes {stable_mosaic.version = 11 : i64} {
  func.func @_conv_bn_silu_kernel(%arg0: i32, %arg1: i32, %arg2: memref<1x1x10x24x128xbf16, #tpu.memory_space<vmem>>, %arg3: memref<3x384x128xbf16, #tpu.memory_space<vmem>>, %arg4: memref<1x128xf32, #tpu.memory_space<vmem>>, %arg5: memref<1x8x16x128xf32, #tpu.memory_space<vmem>>, %arg6: memref<128x128xf32, #tpu.memory_space<vmem>>) attributes {dimension_semantics = [#tpu.dimension_semantics<parallel>, #tpu.dimension_semantics<parallel>], iteration_bounds = array<i64: 2, 2>, scalar_prefetch = 0 : i64, scratch_operands = 1 : i64, tpu.core_type = #tpu.core_type<tc>, window_params = [{transform_indices = @transform_0, window_bounds = array<i64: 1, 1, 10, 24, 128>}, {pipeline_mode = #tpu.pipeline_mode<synchronous>, transform_indices = @transform_1, window_bounds = array<i64: 3, 384, 128>}, {pipeline_mode = #tpu.pipeline_mode<synchronous>, transform_indices = @transform_2, window_bounds = array<i64: 1, 128>}, {transform_indices = @transform_3, window_bounds = array<i64: 1, 8, 16, 128>}]} {
    %c0 = arith.constant 0 : index
    %c0_0 = arith.constant 0 : index
    %c0_1 = arith.constant 0 : index
    %c0_2 = arith.constant 0 : index
    %c0_3 = arith.constant 0 : index
    %0 = vector.load %arg2[%c0, %c0_0, %c0_1, %c0_2, %c0_3] : memref<1x1x10x24x128xbf16, #tpu.memory_space<vmem>>, vector<1x1x10x16x128xbf16>
    %1 = vector.shape_cast %0 : vector<1x1x10x16x128xbf16> to vector<10x16x128xbf16>
    %2 = vector.extract_strided_slice %1 {offsets = [0, 0, 0], sizes = [8, 16, 128], strides = [1, 1, 1]} : vector<10x16x128xbf16> to vector<8x16x128xbf16>
    %3 = vector.extract_strided_slice %1 {offsets = [1, 0, 0], sizes = [8, 16, 128], strides = [1, 1, 1]} : vector<10x16x128xbf16> to vector<8x16x128xbf16>
    %4 = vector.extract_strided_slice %1 {offsets = [2, 0, 0], sizes = [8, 16, 128], strides = [1, 1, 1]} : vector<10x16x128xbf16> to vector<8x16x128xbf16>
    %5 = tpu.concatenate %2, %3, %4 in 2 : vector<8x16x128xbf16>, vector<8x16x128xbf16>, vector<8x16x128xbf16> -> vector<8x16x384xbf16>
    %6 = vector.shape_cast %5 : vector<8x16x384xbf16> to vector<128x384xbf16>
    %c0_4 = arith.constant 0 : index
    %c0_5 = arith.constant 0 : index
    %c0_6 = arith.constant 0 : index
    %7 = vector.load %arg3[%c0_4, %c0_5, %c0_6] : memref<3x384x128xbf16, #tpu.memory_space<vmem>>, vector<1x384x128xbf16>
    %8 = vector.shape_cast %7 : vector<1x384x128xbf16> to vector<384x128xbf16>
    %cst = arith.constant dense<0.000000e+00> : vector<128x128xf32>
    %9 = tpu.matmul %6, %8, %cst {dimension_numbers = #tpu.dot_dimension_numbers<[1], [0], [0], [1], [0, 0, 1, 1], [], []>} : vector<128x384xbf16>, vector<384x128xbf16>, vector<128x128xf32> -> vector<128x128xf32>
    %c0_7 = arith.constant 0 : index
    %c0_8 = arith.constant 0 : index
    %10 = vector.load %arg6[%c0_7, %c0_8] : memref<128x128xf32, #tpu.memory_space<vmem>>, vector<128x128xf32>
    tpu.vector_store %arg6[%c0_7, %c0_8], %9 {strides = array<i32>} : memref<128x128xf32, #tpu.memory_space<vmem>>, vector<128x128xf32>,
    %c0_9 = arith.constant 0 : index
    %c0_10 = arith.constant 0 : index
    %c0_11 = arith.constant 0 : index
    %c1 = arith.constant 1 : index
    %c0_12 = arith.constant 0 : index
    %11 = vector.load %arg2[%c0_9, %c0_10, %c0_11, %c1, %c0_12] : memref<1x1x10x24x128xbf16, #tpu.memory_space<vmem>>, vector<1x1x10x16x128xbf16>
    %12 = vector.shape_cast %11 : vector<1x1x10x16x128xbf16> to vector<10x16x128xbf16>
    %13 = vector.extract_strided_slice %12 {offsets = [0, 0, 0], sizes = [8, 16, 128], strides = [1, 1, 1]} : vector<10x16x128xbf16> to vector<8x16x128xbf16>
    %14 = vector.extract_strided_slice %12 {offsets = [1, 0, 0], sizes = [8, 16, 128], strides = [1, 1, 1]} : vector<10x16x128xbf16> to vector<8x16x128xbf16>
    %15 = vector.extract_strided_slice %12 {offsets = [2, 0, 0], sizes = [8, 16, 128], strides = [1, 1, 1]} : vector<10x16x128xbf16> to vector<8x16x128xbf16>
    %16 = tpu.concatenate %13, %14, %15 in 2 : vector<8x16x128xbf16>, vector<8x16x128xbf16>, vector<8x16x128xbf16> -> vector<8x16x384xbf16>
    %17 = vector.shape_cast %16 : vector<8x16x384xbf16> to vector<128x384xbf16>
    %c1_13 = arith.constant 1 : index
    %c0_14 = arith.constant 0 : index
    %c0_15 = arith.constant 0 : index
    %18 = vector.load %arg3[%c1_13, %c0_14, %c0_15] : memref<3x384x128xbf16, #tpu.memory_space<vmem>>, vector<1x384x128xbf16>
    %19 = vector.shape_cast %18 : vector<1x384x128xbf16> to vector<384x128xbf16>
    %cst_16 = arith.constant dense<0.000000e+00> : vector<128x128xf32>
    %20 = tpu.matmul %17, %19, %cst_16 {dimension_numbers = #tpu.dot_dimension_numbers<[1], [0], [0], [1], [0, 0, 1, 1], [], []>} : vector<128x384xbf16>, vector<384x128xbf16>, vector<128x128xf32> -> vector<128x128xf32>
    %c0_17 = arith.constant 0 : index
    %c0_18 = arith.constant 0 : index
    %21 = vector.load %arg6[%c0_17, %c0_18] : memref<128x128xf32, #tpu.memory_space<vmem>>, vector<128x128xf32>
    %22 = arith.addf %21, %20 : vector<128x128xf32>
    %c0_19 = arith.constant 0 : index
    %c0_20 = arith.constant 0 : index
    %23 = vector.load %arg6[%c0_19, %c0_20] : memref<128x128xf32, #tpu.memory_space<vmem>>, vector<128x128xf32>
    tpu.vector_store %arg6[%c0_19, %c0_20], %22 {strides = array<i32>} : memref<128x128xf32, #tpu.memory_space<vmem>>, vector<128x128xf32>,
    %c0_21 = arith.constant 0 : index
    %c0_22 = arith.constant 0 : index
    %c0_23 = arith.constant 0 : index
    %c2 = arith.constant 2 : index
    %c0_24 = arith.constant 0 : index
    %24 = vector.load %arg2[%c0_21, %c0_22, %c0_23, %c2, %c0_24] : memref<1x1x10x24x128xbf16, #tpu.memory_space<vmem>>, vector<1x1x10x16x128xbf16>
    %25 = vector.shape_cast %24 : vector<1x1x10x16x128xbf16> to vector<10x16x128xbf16>
    %26 = vector.extract_strided_slice %25 {offsets = [0, 0, 0], sizes = [8, 16, 128], strides = [1, 1, 1]} : vector<10x16x128xbf16> to vector<8x16x128xbf16>
    %27 = vector.extract_strided_slice %25 {offsets = [1, 0, 0], sizes = [8, 16, 128], strides = [1, 1, 1]} : vector<10x16x128xbf16> to vector<8x16x128xbf16>
    %28 = vector.extract_strided_slice %25 {offsets = [2, 0, 0], sizes = [8, 16, 128], strides = [1, 1, 1]} : vector<10x16x128xbf16> to vector<8x16x128xbf16>
    %29 = tpu.concatenate %26, %27, %28 in 2 : vector<8x16x128xbf16>, vector<8x16x128xbf16>, vector<8x16x128xbf16> -> vector<8x16x384xbf16>
    %30 = vector.shape_cast %29 : vector<8x16x384xbf16> to vector<128x384xbf16>
    %c2_25 = arith.constant 2 : index
    %c0_26 = arith.constant 0 : index
    %c0_27 = arith.constant 0 : index
    %31 = vector.load %arg3[%c2_25, %c0_26, %c0_27] : memref<3x384x128xbf16, #tpu.memory_space<vmem>>, vector<1x384x128xbf16>
    %32 = vector.shape_cast %31 : vector<1x384x128xbf16> to vector<384x128xbf16>
    %cst_28 = arith.constant dense<0.000000e+00> : vector<128x128xf32>
    %33 = tpu.matmul %30, %32, %cst_28 {dimension_numbers = #tpu.dot_dimension_numbers<[1], [0], [0], [1], [0, 0, 1, 1], [], []>} : vector<128x384xbf16>, vector<384x128xbf16>, vector<128x128xf32> -> vector<128x128xf32>
    %c0_29 = arith.constant 0 : index
    %c0_30 = arith.constant 0 : index
    %34 = vector.load %arg6[%c0_29, %c0_30] : memref<128x128xf32, #tpu.memory_space<vmem>>, vector<128x128xf32>
    %35 = arith.addf %34, %33 : vector<128x128xf32>
    %c0_31 = arith.constant 0 : index
    %c0_32 = arith.constant 0 : index
    %36 = vector.load %arg6[%c0_31, %c0_32] : memref<128x128xf32, #tpu.memory_space<vmem>>, vector<128x128xf32>
    tpu.vector_store %arg6[%c0_31, %c0_32], %35 {strides = array<i32>} : memref<128x128xf32, #tpu.memory_space<vmem>>, vector<128x128xf32>,
    %c0_33 = arith.constant 0 : index
    %c0_34 = arith.constant 0 : index
    %37 = vector.load %arg6[%c0_33, %c0_34] : memref<128x128xf32, #tpu.memory_space<vmem>>, vector<128x128xf32>
    %c0_35 = arith.constant 0 : index
    %c0_36 = arith.constant 0 : index
    %38 = vector.load %arg4[%c0_35, %c0_36] : memref<1x128xf32, #tpu.memory_space<vmem>>, vector<1x128xf32>
    %39 = vector.shape_cast %38 : vector<1x128xf32> to vector<128xf32>
    %40 = vector.shape_cast %39 : vector<128xf32> to vector<1x128xf32>
    %41 = vector.broadcast %40 : vector<1x128xf32> to vector<128x128xf32>
    %42 = arith.addf %37, %41 : vector<128x128xf32>
    %43 = arith.negf %42 : vector<128x128xf32>
    %44 = math.exp %43 : vector<128x128xf32>
    %cst_37 = arith.constant 1.000000e+00 : f32
    %45 = vector.broadcast %cst_37 : f32 to vector<128x128xf32>
    %46 = arith.addf %45, %44 : vector<128x128xf32>
    %47 = arith.divf %45, %46 : vector<128x128xf32>
    %48 = arith.mulf %42, %47 : vector<128x128xf32>
    %49 = vector.shape_cast %48 : vector<128x128xf32> to vector<8x16x128xf32>
    %c0_38 = arith.constant 0 : index
    %c0_39 = arith.constant 0 : index
    %c0_40 = arith.constant 0 : index
    %c0_41 = arith.constant 0 : index
    %50 = vector.load %arg5[%c0_38, %c0_39, %c0_40, %c0_41] : memref<1x8x16x128xf32, #tpu.memory_space<vmem>>, vector<1x8x16x128xf32>
    %51 = vector.shape_cast %50 : vector<1x8x16x128xf32> to vector<8x16x128xf32>
    %52 = vector.shape_cast %49 : vector<8x16x128xf32> to vector<1x8x16x128xf32>
    tpu.vector_store %arg5[%c0_38, %c0_39, %c0_40, %c0_41], %52 {strides = array<i32>} : memref<1x8x16x128xf32, #tpu.memory_space<vmem>>, vector<1x8x16x128xf32>,
    return
  }
  func.func @transform_0(%arg0: i32, %arg1: i32) -> (i32, i32, i32, i32, i32) {
    %c0_i32 = arith.constant 0 : i32
    %c0_i32_0 = arith.constant 0 : i32
    %c0_i32_1 = arith.constant 0 : i32
    %c0_i32_2 = arith.constant 0 : i32
    return %arg0, %arg1, %c0_i32, %c0_i32_0, %c0_i32_1 : i32, i32, i32, i32, i32
  }
  func.func @transform_1(%arg0: i32, %arg1: i32) -> (i32, i32, i32) {
    %c0_i32 = arith.constant 0 : i32
    %c0_i32_0 = arith.constant 0 : i32
    %c0_i32_1 = arith.constant 0 : i32
    %c0_i32_2 = arith.constant 0 : i32
    return %c0_i32, %c0_i32_0, %c0_i32_1 : i32, i32, i32
  }
  func.func @transform_2(%arg0: i32, %arg1: i32) -> (i32, i32) {
    %c0_i32 = arith.constant 0 : i32
    %c0_i32_0 = arith.constant 0 : i32
    %c0_i32_1 = arith.constant 0 : i32
    return %c0_i32, %c0_i32_0 : i32, i32
  }
  func.func @transform_3(%arg0: i32, %arg1: i32) -> (i32, i32, i32, i32) {
    %c0_i32 = arith.constant 0 : i32
    %c0_i32_0 = arith.constant 0 : i32
    %c0_i32_1 = arith.constant 0 : i32
    return %arg0, %arg1, %c0_i32, %c0_i32_0 : i32, i32, i32, i32
  }
}

</mosaic_0001>

<llo_original>
// kernel: tpu_custom_call.1
$region0: #{tpu_custom_call.1}
  #allocation0 [shape = 'u32[]', space=smem, size = 0x4, offset = 0x4, fixed_abs, tag = 'smem constant byte address 0x4 - core index']
  #allocation1 [shape = 'u32[144,128]{1,0:T(1,128)}', space=vmem, size = 0x12000, scoped, tag = 'internal scratch']
  #allocation2 [shape = 'f32[128,128]{1,0:T(8,128)}', space=vmem, size = 0x10000, scoped, tag = 'scratch operand']
  %s0 = inlined_call_operand.hbm [shape: bf16[2,2,10,24,128], index: 0, kind: input, shape index: {}]
  %s1 = inlined_call_operand.hbm [shape: bf16[3,384,128], index: 1, kind: input, shape index: {}]
  %s2 = inlined_call_operand.vmem [shape: f32[1,128], index: 2, kind: input, shape index: {}]
  %s3 = inlined_call_operand.hbm [shape: f32[2,16,16,128], index: 3, kind: output, shape index: {}]
  %s4 = sld [smem:[#allocation0]]
  $region53: #{tpu_custom_call.1} parent=0
    _
  %s6 = ssub.s32 1, %s4
  %s7 = scalar_select 0, %s6, %s4
  $region1: #{tpu_custom_call.1} parent=0
    #allocation3 [shape = 'u8[122880]{0}', space=vmem, size = 0x1e000, scoped, tag = 'input window, operand 0']
    #allocation4 [shape = 's32[2]{0}', space=sflag, size = 0x8, scoped, tag = 'scoped memory for tpu_custom_call.1']
    #allocation5 [shape = 's32[2]{0}', space=sflag, size = 0x8, scoped, tag = 'scoped memory for tpu_custom_call.1']
    #allocation6 [shape = 'u8[294912]{0}', space=vmem, size = 0x48000, scoped, tag = 'input window, operand 1, single buffered']
    #allocation7 [shape = 's32[1]{0}', space=sflag, size = 0x4, scoped, tag = 'scoped memory for tpu_custom_call.1']
    #allocation8 [shape = 'u8[131072]{0}', space=vmem, size = 0x20000, scoped, tag = 'output window, operand 0']
    %8 = vsyncpa [#allocation4], 0
    %s9 = scalar_lea.sflag [#allocation4], 1
    %10 = vsyncpa %s9, 0
    %11 = vsyncpa [#allocation7], 0
    %12 = vsyncpa [#allocation5], 0
    %s13 = scalar_lea.sflag [#allocation5], 1
    %14 = vsyncpa %s13, 0
    loop: start=0, step=1, limit=6
    $region2: #{tpu_custom_call.1} parent=1 // loop_pre_header
      _
    $region3: #{tpu_custom_call.1} parent=1 // loop_header
      %s16 = sphi 0, %s20
      %p17 = scmp.ge.s32.totalorder %s16, 6
      %s23 = sphi 0, %s35
      %s24 = sphi 0, %s31
      %s25 = sphi 0, %s23
      %s26 = sphi 0, %s24
      %s27 = sphi 0, %s25
      %s28 = sphi 0, %s26
      %s40 = sphi 0, %s42
      %s43 = sphi 0, %s40
      %s44 = sphi 0, %s43
      %s60 = sphi 0, %s44
      %s64 = sphi 0, %s64
      %s66 = sphi 0, %s64
      %s67 = sphi 0, %s66
      %s81 = sphi 0, %s67
      %s85 = sphi 0, %s85
      %s87 = sphi 0, %s85
      %s88 = sphi 0, %s87
      %s102 = sphi 0, %s88
      %s110 = sphi 0, %s112
      %s113 = sphi 0, %s110
      %s114 = sphi 0, %s113
      %s130 = sphi 0, %s114
    $region4: #{tpu_custom_call.1} parent=1 // loop_header_branch
      %19 = sbr.rel (%p17) target = $region8
    $region5: #{tpu_custom_call.1} parent=1 // loop_body
      %s21 = ssub.s32 %s16, 1
      %s22 = ssub.s32 %s16, 2
      %s29 = sadd.s32 1, %s24
      %p30 = scmp.ge.s32.totalorder %s29, 2
      %s31 = scalar_select %p30, 0, %s29
      %s32 = sadd.s32 1, %s23
      %s33 = scalar_select %p30, %s32, %s23
      %p34 = scmp.ge.s32.totalorder %s33, 2
      %s35 = scalar_select %p34, 0, %s33
      %s36 = ssub.s32 %s23, %s35
      %s37 = ssub.s32 %s24, %s31
      %s38 = sor.u32 %s36, %s37
      %p39 = scmp.eq.s32.totalorder %s38, 0
      %s41 = sadd.s32 %s40, 1
      %s42 = scalar_select %p39, %s40, %s41
      %p45 = pneg %p39
      %p46 = scmp.eq.s32.totalorder %s16, 3
      %p47 = por %p45, %p46
      %p48 = scmp.ne.s32.totalorder %s40, %s43
      %p49 = scmp.eq.s32.totalorder %s16, 0
      %p50 = por %p48, %p49
      %p51 = scmp.ne.s32.totalorder %s40, %s43
      %p52 = scmp.eq.s32.totalorder %s21, 3
      %p53 = por %p51, %p52
      %p54 = scmp.ne.s32.totalorder %s43, %s44
      %p55 = scmp.eq.s32.totalorder %s21, 0
      %p56 = por %p54, %p55
      %p57 = scmp.ne.s32.totalorder %s43, %s44
      %p58 = scmp.eq.s32.totalorder %s22, 3
      %p59 = por %p57, %p58
      %p61 = scmp.ne.s32.totalorder %s44, %s60
      %p62 = scmp.eq.s32.totalorder %s22, 0
      %p63 = por %p61, %p62
      %s65 = sadd.s32 %s64, 1
      %p68 = scmp.eq.s32.totalorder %s16, 3
      %p69 = scmp.ne.s32.totalorder %s64, %s66
      %p70 = scmp.eq.s32.totalorder %s16, 0
      %p71 = por %p69, %p70
      %p72 = scmp.ne.s32.totalorder %s64, %s66
      %p73 = scmp.eq.s32.totalorder %s21, 3
      %p74 = por %p72, %p73
      %p75 = scmp.ne.s32.totalorder %s66, %s67
      %p76 = scmp.eq.s32.totalorder %s21, 0
      %p77 = por %p75, %p76
      %p78 = scmp.ne.s32.totalorder %s66, %s67
      %p79 = scmp.eq.s32.totalorder %s22, 3
      %p80 = por %p78, %p79
      %p82 = scmp.ne.s32.totalorder %s67, %s81
      %p83 = scmp.eq.s32.totalorder %s22, 0
      %p84 = por %p82, %p83
      %s86 = sadd.s32 %s85, 1
      %p89 = scmp.eq.s32.totalorder %s16, 3
      %p90 = scmp.ne.s32.totalorder %s85, %s87
      %p91 = scmp.eq.s32.totalorder %s16, 0
      %p92 = por %p90, %p91
      %p93 = scmp.ne.s32.totalorder %s85, %s87
      %p94 = scmp.eq.s32.totalorder %s21, 3
      %p95 = por %p93, %p94
      %p96 = scmp.ne.s32.totalorder %s87, %s88
      %p97 = scmp.eq.s32.totalorder %s21, 0
      %p98 = por %p96, %p97
      %p99 = scmp.ne.s32.totalorder %s87, %s88
      %p100 = scmp.eq.s32.totalorder %s22, 3
      %p101 = por %p99, %p100
      %p103 = scmp.ne.s32.totalorder %s88, %s102
      %p104 = scmp.eq.s32.totalorder %s22, 0
      %p105 = por %p103, %p104
      %s106 = ssub.s32 %s23, %s35
      %s107 = ssub.s32 %s24, %s31
      %s108 = sor.u32 %s106, %s107
      %p109 = scmp.eq.s32.totalorder %s108, 0
      %s111 = sadd.s32 %s110, 1
      %s112 = scalar_select %p109, %s110, %s111
      %p115 = pneg %p109
      %p116 = scmp.eq.s32.totalorder %s16, 3
      %p117 = por %p115, %p116
      %p118 = scmp.ne.s32.totalorder %s110, %s113
      %p119 = scmp.eq.s32.totalorder %s16, 0
      %p120 = por %p118, %p119
      %p121 = scmp.ne.s32.totalorder %s110, %s113
      %p122 = scmp.eq.s32.totalorder %s21, 3
      %p123 = por %p121, %p122
      %p124 = scmp.ne.s32.totalorder %s113, %s114
      %p125 = scmp.eq.s32.totalorder %s21, 0
      %p126 = por %p124, %p125
      %p127 = scmp.ne.s32.totalorder %s113, %s114
      %p128 = scmp.eq.s32.totalorder %s22, 3
      %p129 = por %p127, %p128
      %p131 = scmp.ne.s32.totalorder %s114, %s130
      %p132 = scmp.eq.s32.totalorder %s22, 0
      %p133 = por %p131, %p132
      %p134 = scmp.le.s32.totalorder 1, %s16
      %p135 = scmp.lt.s32.totalorder %s16, 5
      %p136 = pnand %p134, %p135
      %p137 = pneg %p136
      // Predicated region
      $region9: #{tpu_custom_call.1} parent=5 // pred_check
        _
      $region10: #{tpu_custom_call.1} parent=5 // pred_check_branch
        %139 = sbr.rel (%p136) target = $region12
      $region11: #{tpu_custom_call.1} parent=5 // pred_region
        %s140 = ssub.s32 %s16, 1
        // Predicated region
        $region13: #{tpu_custom_call.1} parent=11 // pred_check
          %p141 = pneg %p77
        $region14: #{tpu_custom_call.1} parent=11 // pred_check_branch
          %143 = sbr.rel (%p141) target = $region16
        $region15: #{tpu_custom_call.1} parent=11 // pred_region
          %s145 = ssub.s32 9216, 9216
          %146 = vsyncadd [#allocation7], %s145
          %s147 = sshll.u32 [#allocation6], 4
          %s148 = int_to_ptr.vmem [resolvable:$true] %s147
          %153 = dma.hbm_to_vmem [thread:$0]  %s1, 9216, %s148, [#allocation7], 64, 64, 4
        $region16: #{tpu_custom_call.1} parent=11 // pred_fallthru
          _
        // Predicated region
        $region17: #{tpu_custom_call.1} parent=11 // pred_check
          %p154 = pneg %p98
        $region18: #{tpu_custom_call.1} parent=11 // pred_check_branch
          %156 = sbr.rel (%p154) target = $region20
        $region19: #{tpu_custom_call.1} parent=11 // pred_region
          _
        $region20: #{tpu_custom_call.1} parent=11 // pred_fallthru
          _
      $region12: #{tpu_custom_call.1} parent=5 // pred_fallthru
        _
      %p157 = scmp.lt.s32.totalorder %s16, 4
      // Predicated region
      $region21: #{tpu_custom_call.1} parent=5 // pred_check
        %p158 = pneg %p157
      $region22: #{tpu_custom_call.1} parent=5 // pred_check_branch
        %160 = sbr.rel (%p158) target = $region24
      $region23: #{tpu_custom_call.1} parent=5 // pred_region
        // Predicated region
        $region25: #{tpu_custom_call.1} parent=23 // pred_check
          %p161 = pneg %p50
        $region26: #{tpu_custom_call.1} parent=23 // pred_check_branch
          %163 = sbr.rel (%p161) target = $region28
        $region27: #{tpu_custom_call.1} parent=23 // pred_region
          %s164 = sand.u32 %s40, 1
          %s165 = scalar_lea.sflag [#allocation4], %s164
          %s166 = sand.u32 %s40, 1
          %s167 = smul.addr %s166, 120
          %s168 = scalar_lea.vmem [#allocation3], %s167
          %s170 = ssub.s32 1920, 1920
          %171 = vsyncadd %s165, %s170
          %s172 = smul.addr %s24, 30
          %s173 = smul.addr %s23, 60
          %s174 = sadd.s32 %s172, %s173
          %s175 = smul.addr %s174, 64
          %s176 = scalar_lea.hbm %s0, %s175
          %s177 = sshll.u32 %s168, 4
          %s178 = int_to_ptr.vmem [resolvable:$true] %s177
          %183 = dma.hbm_to_vmem [thread:$0]  %s176, 1920, %s178, %s165, 64, 64, 4
        $region28: #{tpu_custom_call.1} parent=23 // pred_fallthru
          _
      $region24: #{tpu_custom_call.1} parent=5 // pred_fallthru
        _
      %p184 = scmp.le.s32.totalorder 1, %s16
      %p185 = scmp.lt.s32.totalorder %s16, 5
      %p186 = pnand %p184, %p185
      %p187 = pneg %p186
      // Predicated region
      $region29: #{tpu_custom_call.1} parent=5 // pred_check
        _
      $region30: #{tpu_custom_call.1} parent=5 // pred_check_branch
        %189 = sbr.rel (%p186) target = $region32
      $region31: #{tpu_custom_call.1} parent=5 // pred_region
        %s190 = ssub.s32 %s16, 1
        %s191 = sand.u32 %s43, 1
        %s192 = scalar_lea.sflag [#allocation4], %s191
        %s193 = sand.u32 %s43, 1
        %s194 = smul.addr %s193, 120
        %s195 = scalar_lea.vmem [#allocation3], %s194
        // Predicated region
        $region33: #{tpu_custom_call.1} parent=31 // pred_check
          %p196 = pneg %p56
        $region34: #{tpu_custom_call.1} parent=31 // pred_check_branch
          %198 = sbr.rel (%p196) target = $region36
        $region35: #{tpu_custom_call.1} parent=31 // pred_region
          %199 = dma.done %s192, 1920
        $region36: #{tpu_custom_call.1} parent=31 // pred_fallthru
          _
        // Predicated region
        $region37: #{tpu_custom_call.1} parent=31 // pred_check
          %p200 = pneg %p77
        $region38: #{tpu_custom_call.1} parent=31 // pred_check_branch
          %202 = sbr.rel (%p200) target = $region40
        $region39: #{tpu_custom_call.1} parent=31 // pred_region
          %203 = dma.done [#allocation7], 9216
        $region40: #{tpu_custom_call.1} parent=31 // pred_fallthru
          _
        %s204 = sand.u32 %s43, 1
        %s205 = scalar_lea.sflag [#allocation4], %s204
        %s206 = sand.u32 %s43, 1
        %s207 = smul.addr %s206, 120
        %s208 = scalar_lea.vmem [#allocation3], %s207
        %p209 = pneg %p56
        %p210 = pneg %p53
        %p211 = pneg %p77
        %p212 = pneg %p74
        %p213 = pneg %p98
        %p214 = pneg %p95
        %p215 = pneg %p126
        %p216 = pneg %p123
        %s217 = sand.u32 %s113, 1
        %s218 = scalar_lea.sflag [#allocation5], %s217
        %s219 = sand.u32 %s113, 1
        %s220 = smul.addr %s219, 128
        %s221 = scalar_lea.vmem [#allocation8], %s220
        %s222 = smul.u32 8, %s26
        %v224 = vld [vmem:[%s195] sm:$0xf]
        %v225 = vld [vmem:[%s195 + $0x4] sm:$0xf]
        %v226 = vld [vmem:[%s195 + $0xc] sm:$0xf]
        %v227 = vld [vmem:[%s195 + $0x10] sm:$0xf]
        %v228 = vld [vmem:[%s195 + $0x18] sm:$0xf]
        %v229 = vld [vmem:[%s195 + $0x1c] sm:$0xf]
        %v230 = vld [vmem:[%s195 + $0x24] sm:$0xf]
        %v231 = vld [vmem:[%s195 + $0x28] sm:$0xf]
        %v232 = vld [vmem:[%s195 + $0x30] sm:$0xf]
        %v233 = vld [vmem:[%s195 + $0x34] sm:$0xf]
        %v234 = vld [vmem:[%s195 + $0x3c] sm:$0xf]
        %v235 = vld [vmem:[%s195 + $0x40] sm:$0xf]
        %v236 = vld [vmem:[%s195 + $0x48] sm:$0xf]
        %v237 = vld [vmem:[%s195 + $0x4c] sm:$0xf]
        %v238 = vld [vmem:[%s195 + $0x54] sm:$0xf]
        %v239 = vld [vmem:[%s195 + $0x58] sm:$0xf]
        %v240 = vld [vmem:[%s195 + $0x60] sm:$0xf]
        %v241 = vld [vmem:[%s195 + $0x64] sm:$0xf]
        %v242 = vld [vmem:[%s195 + $0x6c] sm:$0xf]
        %v243 = vld [vmem:[%s195 + $0x70] sm:$0xf]
        %v260 = vunpack.c.l.b16 %v224
        %v261 = vunpack.c.l.b16 %v225
        %v262 = vunpack.c.l.b16 %v226
        %v263 = vunpack.c.l.b16 %v227
        %v264 = vunpack.c.l.b16 %v228
        %v265 = vunpack.c.l.b16 %v229
        %v266 = vunpack.c.l.b16 %v230
        %v267 = vunpack.c.l.b16 %v231
        %v268 = vunpack.c.l.b16 %v232
        %v269 = vunpack.c.l.b16 %v233
        %v270 = vunpack.c.l.b16 %v234
        %v271 = vunpack.c.l.b16 %v235
        %v272 = vunpack.c.l.b16 %v236
        %v273 = vunpack.c.l.b16 %v237
        %v274 = vunpack.c.l.b16 %v238
        %v275 = vunpack.c.l.b16 %v239
        %v276 = vpack.c.b16 %v261, %v260
        %v277 = vpack.c.b16 %v263, %v262
        %v278 = vpack.c.b16 %v265, %v264
        %v279 = vpack.c.b16 %v267, %v266
        %v280 = vpack.c.b16 %v269, %v268
        %v281 = vpack.c.b16 %v271, %v270
        %v282 = vpack.c.b16 %v273, %v272
        %v283 = vpack.c.b16 %v275, %v274
        %v294 = vunpack.c.l.b16 %v240
        %v295 = vunpack.c.l.b16 %v241
        %v296 = vpack.c.b16 %v295, %v294
        %v300 = vunpack.c.l.b16 %v242
        %v301 = vunpack.c.l.b16 %v243
        %v302 = vpack.c.b16 %v301, %v300
        %v304 = vld [vmem:[#allocation6] sm:$0xf]
        %v305 = vld [vmem:[#allocation6 + $0x4] sm:$0xf]
        %v306 = vld [vmem:[#allocation6 + $0x8] sm:$0xf]
        %v307 = vld [vmem:[#allocation6 + $0xc] sm:$0xf]
        %v308 = vld [vmem:[#allocation6 + $0x10] sm:$0xf]
        %v309 = vld [vmem:[#allocation6 + $0x14] sm:$0xf]
        %v310 = vld [vmem:[#allocation6 + $0x18] sm:$0xf]
        %v311 = vld [vmem:[#allocation6 + $0x1c] sm:$0xf]
        %v312 = vld [vmem:[#allocation6 + $0x20] sm:$0xf]
        %v313 = vld [vmem:[#allocation6 + $0x24] sm:$0xf]
        %v314 = vld [vmem:[#allocation6 + $0x28] sm:$0xf]
        %v315 = vld [vmem:[#allocation6 + $0x2c] sm:$0xf]
        %v316 = vld [vmem:[#allocation6 + $0x30] sm:$0xf]
        %v317 = vld [vmem:[#allocation6 + $0x34] sm:$0xf]
        %v318 = vld [vmem:[#allocation6 + $0x38] sm:$0xf]
        %v319 = vld [vmem:[#allocation6 + $0x3c] sm:$0xf]
        %v320 = vld [vmem:[#allocation6 + $0x40] sm:$0xf]
        %v321 = vld [vmem:[#allocation6 + $0x44] sm:$0xf]
        %v322 = vld [vmem:[#allocation6 + $0x48] sm:$0xf]
        %v323 = vld [vmem:[#allocation6 + $0x4c] sm:$0xf]
        %v324 = vld [vmem:[#allocation6 + $0x50] sm:$0xf]
        %v325 = vld [vmem:[#allocation6 + $0x54] sm:$0xf]
        %v326 = vld [vmem:[#allocation6 + $0x58] sm:$0xf]
        %v327 = vld [vmem:[#allocation6 + $0x5c] sm:$0xf]
        %v328 = vld [vmem:[#allocation6 + $0x60] sm:$0xf]
        %v329 = vld [vmem:[#allocation6 + $0x64] sm:$0xf]
        %v330 = vld [vmem:[#allocation6 + $0x68] sm:$0xf]
        %v331 = vld [vmem:[#allocation6 + $0x6c] sm:$0xf]
        %v332 = vld [vmem:[#allocation6 + $0x70] sm:$0xf]
        %v333 = vld [vmem:[#allocation6 + $0x74] sm:$0xf]
        %v334 = vld [vmem:[#allocation6 + $0x78] sm:$0xf]
        %v335 = vld [vmem:[#allocation6 + $0x7c] sm:$0xf]
        %v336 = vld [vmem:[#allocation6 + $0x80] sm:$0xf]
        %v337 = vld [vmem:[#allocation6 + $0x84] sm:$0xf]
        %v338 = vld [vmem:[#allocation6 + $0x88] sm:$0xf]
        %v339 = vld [vmem:[#allocation6 + $0x8c] sm:$0xf]
        %v340 = vld [vmem:[#allocation6 + $0x90] sm:$0xf]
        %v341 = vld [vmem:[#allocation6 + $0x94] sm:$0xf]
        %v342 = vld [vmem:[#allocation6 + $0x98] sm:$0xf]
        %v343 = vld [vmem:[#allocation6 + $0x9c] sm:$0xf]
        %v344 = vld [vmem:[#allocation6 + $0xa0] sm:$0xf]
        %v345 = vld [vmem:[#allocation6 + $0xa4] sm:$0xf]
        %v346 = vld [vmem:[#allocation6 + $0xa8] sm:$0xf]
        %v347 = vld [vmem:[#allocation6 + $0xac] sm:$0xf]
        %v348 = vld [vmem:[#allocation6 + $0xb0] sm:$0xf]
        %v349 = vld [vmem:[#allocation6 + $0xb4] sm:$0xf]
        %v350 = vld [vmem:[#allocation6 + $0xb8] sm:$0xf]
        %v351 = vld [vmem:[#allocation6 + $0xbc] sm:$0xf]
        %v400 = vunpack.c.l.b16 %v304
        %v401 = vunpack.c.l.b16 %v305
        %v402 = vunpack.c.l.b16 %v306
        %v403 = vunpack.c.l.b16 %v307
        %v404 = vunpack.c.l.b16 %v308
        %v405 = vunpack.c.l.b16 %v309
        %v406 = vunpack.c.l.b16 %v310
        %v407 = vunpack.c.l.b16 %v311
        %v408 = vunpack.c.l.b16 %v312
        %v409 = vunpack.c.l.b16 %v313
        %v410 = vunpack.c.l.b16 %v314
        %v411 = vunpack.c.l.b16 %v315
        %v412 = vunpack.c.l.b16 %v316
        %v413 = vunpack.c.l.b16 %v317
        %v414 = vunpack.c.l.b16 %v318
        %v415 = vunpack.c.l.b16 %v319
        %v416 = vunpack.c.l.b16 %v320
        %v417 = vunpack.c.l.b16 %v321
        %v418 = vunpack.c.l.b16 %v322
        %v419 = vunpack.c.l.b16 %v323
        %v420 = vunpack.c.l.b16 %v324
        %v421 = vunpack.c.l.b16 %v325
        %v422 = vunpack.c.l.b16 %v326
        %v423 = vunpack.c.l.b16 %v327
        %v424 = vunpack.c.l.b16 %v328
        %v425 = vunpack.c.l.b16 %v329
        %v426 = vunpack.c.l.b16 %v330
        %v427 = vunpack.c.l.b16 %v331
        %v428 = vunpack.c.l.b16 %v332
        %v429 = vunpack.c.l.b16 %v333
        %v430 = vunpack.c.l.b16 %v334
        %v431 = vunpack.c.l.b16 %v335
        %v432 = vunpack.c.l.b16 %v336
        %v433 = vunpack.c.l.b16 %v337
        %v434 = vunpack.c.l.b16 %v338
        %v435 = vunpack.c.l.b16 %v339
        %v436 = vunpack.c.l.b16 %v340
        %v437 = vunpack.c.l.b16 %v341
        %v438 = vunpack.c.l.b16 %v342
        %v439 = vunpack.c.l.b16 %v343
        %v440 = vunpack.c.l.b16 %v344
        %v441 = vunpack.c.l.b16 %v345
        %v442 = vunpack.c.l.b16 %v346
        %v443 = vunpack.c.l.b16 %v347
        %v444 = vunpack.c.l.b16 %v348
        %v445 = vunpack.c.l.b16 %v349
        %v446 = vunpack.c.l.b16 %v350
        %v447 = vunpack.c.l.b16 %v351
        %v448 = vpack.c.b16 %v401, %v400
        %v449 = vpack.c.b16 %v403, %v402
        %v450 = vpack.c.b16 %v405, %v404
        %v451 = vpack.c.b16 %v407, %v406
        %v452 = vpack.c.b16 %v409, %v408
        %v453 = vpack.c.b16 %v411, %v410
        %v454 = vpack.c.b16 %v413, %v412
        %v455 = vpack.c.b16 %v415, %v414
        %v456 = vpack.c.b16 %v417, %v416
        %v457 = vpack.c.b16 %v419, %v418
        %v458 = vpack.c.b16 %v421, %v420
        %v459 = vpack.c.b16 %v423, %v422
        %v460 = vpack.c.b16 %v425, %v424
        %v461 = vpack.c.b16 %v427, %v426
        %v462 = vpack.c.b16 %v429, %v428
        %v463 = vpack.c.b16 %v431, %v430
        %v464 = vpack.c.b16 %v433, %v432
        %v465 = vpack.c.b16 %v435, %v434
        %v466 = vpack.c.b16 %v437, %v436
        %v467 = vpack.c.b16 %v439, %v438
        %v468 = vpack.c.b16 %v441, %v440
        %v469 = vpack.c.b16 %v443, %v442
        %v470 = vpack.c.b16 %v445, %v444
        %v471 = vpack.c.b16 %v447, %v446
        %496 = vmatprep.subr.bf16.mxu0 0
        %497 = vmatpush1.bf16.msra.mxu0 %v448
        %498 = vmatprep.subr.bf16.mxu0 0
        %499 = vmatpush1.bf16.msra.mxu0 %v449
        %500 = vmatprep.subr.bf16.mxu0 0
        %501 = vmatpush1.bf16.msra.mxu0 %v450
        %502 = vmatprep.subr.bf16.mxu0 0
        %503 = vmatpush1.bf16.msra.mxu0 %v451
        %504 = vmatprep.subr.bf16.mxu0 0
        %505 = vmatpush1.bf16.msra.mxu0 %v452
        %506 = vmatprep.subr.bf16.mxu0 0
        %507 = vmatpush1.bf16.msra.mxu0 %v453
        %508 = vmatprep.subr.bf16.mxu0 0
        %509 = vmatpush1.bf16.msra.mxu0 %v454
        %510 = vmatprep.subr.bf16.mxu0 0
        %511 = vmatpush1.bf16.msra.mxu0 %v455
        %512 = vmatprep.subr.bf16.mxu0 0
        %513 = vmatpush1.bf16.msra.mxu0 %v456
        %514 = vmatprep.subr.bf16.mxu0 0
        %515 = vmatpush1.bf16.msra.mxu0 %v457
        %516 = vmatprep.subr.bf16.mxu0 0
        %517 = vmatpush1.bf16.msra.mxu0 %v458
        %518 = vmatprep.subr.bf16.mxu0 0
        %519 = vmatpush1.bf16.msra.mxu0 %v459
        %520 = vmatprep.subr.bf16.mxu0 0
        %521 = vmatpush1.bf16.msra.mxu0 %v460
        %522 = vmatprep.subr.bf16.mxu0 0
        %523 = vmatpush1.bf16.msra.mxu0 %v461
        %524 = vmatprep.subr.bf16.mxu0 0
        %525 = vmatpush1.bf16.msra.mxu0 %v462
        %526 = vmatprep.subr.bf16.mxu0 0
        %527 = vmatpush1.bf16.msra.mxu0 %v463
        %528 = vmatprep.mubr.bf16.mxu0 %v277
        %529 = vmatmul.mubr.bf16.gmra.mrb[0].mxu0 %v276
        %v530 = vpop.f32.mrb[0].mxu0
        %v531 = vadd.f32 0.0, %v530
        %v532 = vpop.f32.mrb[0].mxu0
        %v533 = vpop.f32.mrb[0].mxu0
        %v534 = vadd.f32 0.0, %v533
        %v535 = vpop.f32.mrb[0].mxu0
        %536 = vmatprep.mubr.bf16.mxu0 %v278
        %537 = vmatmul.mubr.bf16.gmra.mrb[0].mxu0 %v277
        %v538 = vpop.f32.mrb[0].mxu0
        %v539 = vadd.f32 0.0, %v538
        %v540 = vpop.f32.mrb[0].mxu0
        %v541 = vpop.f32.mrb[0].mxu0
        %v542 = vadd.f32 0.0, %v541
        %v543 = vpop.f32.mrb[0].mxu0
        %544 = vmatprep.mubr.bf16.mxu0 %v279
        %545 = vmatmul.mubr.bf16.gmra.mrb[0].mxu0 %v278
        %v546 = vpop.f32.mrb[0].mxu0
        %v547 = vadd.f32 0.0, %v546
        %v548 = vpop.f32.mrb[0].mxu0
        %v549 = vpop.f32.mrb[0].mxu0
        %v550 = vadd.f32 0.0, %v549
        %v551 = vpop.f32.mrb[0].mxu0
        %552 = vmatprep.mubr.bf16.mxu0 %v280
        %553 = vmatmul.mubr.bf16.gmra.mrb[0].mxu0 %v279
        %v554 = vpop.f32.mrb[0].mxu0
        %v555 = vadd.f32 0.0, %v554
        %v556 = vpop.f32.mrb[0].mxu0
        %v557 = vpop.f32.mrb[0].mxu0
        %v558 = vadd.f32 0.0, %v557
        %v559 = vpop.f32.mrb[0].mxu0
        %560 = vmatprep.mubr.bf16.mxu0 %v281
        %561 = vmatmul.mubr.bf16.gmra.mrb[0].mxu0 %v280
        %v562 = vpop.f32.mrb[0].mxu0
        %v563 = vadd.f32 0.0, %v562
        %v564 = vpop.f32.mrb[0].mxu0
        %v565 = vpop.f32.mrb[0].mxu0
        %v566 = vadd.f32 0.0, %v565
        %v567 = vpop.f32.mrb[0].mxu0
        %568 = vmatprep.mubr.bf16.mxu0 %v282
        %569 = vmatmul.mubr.bf16.gmra.mrb[0].mxu0 %v281
        %v570 = vpop.f32.mrb[0].mxu0
        %v571 = vadd.f32 0.0, %v570
        %v572 = vpop.f32.mrb[0].mxu0
        %v573 = vpop.f32.mrb[0].mxu0
        %v574 = vadd.f32 0.0, %v573
        %v575 = vpop.f32.mrb[0].mxu0
        %576 = vmatprep.mubr.bf16.mxu0 %v283
        %577 = vmatmul.mubr.bf16.gmra.mrb[0].mxu0 %v282
        %v578 = vpop.f32.mrb[0].mxu0
        %v579 = vadd.f32 0.0, %v578
        %v580 = vpop.f32.mrb[0].mxu0
        %v581 = vpop.f32.mrb[0].mxu0
        %v582 = vadd.f32 0.0, %v581
        %v583 = vpop.f32.mrb[0].mxu0
        %584 = vmatprep.mubr.bf16.mxu0 %v296
        %585 = vmatmul.mubr.bf16.gmra.mrb[0].mxu0 %v283
        %v586 = vpop.f32.mrb[0].mxu0
        %v587 = vadd.f32 0.0, %v586
        %v588 = vpop.f32.mrb[0].mxu0
        %v589 = vpop.f32.mrb[0].mxu0
        %v590 = vadd.f32 0.0, %v589
        %v591 = vpop.f32.mrb[0].mxu0
        %592 = vdwg.mxu0
        %593 = vmatprep.subr.bf16.mxu0 0
        %594 = vmatpush1.bf16.msra.mxu0 %v464
        %595 = vmatprep.subr.bf16.mxu0 0
        %596 = vmatpush1.bf16.msra.mxu0 %v465
        %597 = vmatprep.subr.bf16.mxu0 0
        %598 = vmatpush1.bf16.msra.mxu0 %v466
        %599 = vmatprep.subr.bf16.mxu0 0
        %600 = vmatpush1.bf16.msra.mxu0 %v467
        %601 = vmatprep.subr.bf16.mxu0 0
        %602 = vmatpush1.bf16.msra.mxu0 %v468
        %603 = vmatprep.subr.bf16.mxu0 0
        %604 = vmatpush1.bf16.msra.mxu0 %v469
        %605 = vmatprep.subr.bf16.mxu0 0
        %606 = vmatpush1.bf16.msra.mxu0 %v470
        %607 = vmatprep.subr.bf16.mxu0 0
        %608 = vmatpush1.bf16.msra.mxu0 %v471
        %609 = vmatprep.subr.bf16.mxu0 0
        %610 = vmatpush1.bf16.msra.mxu0 0
        %611 = vmatprep.subr.bf16.mxu0 0
        %612 = vmatpush1.bf16.msra.mxu0 0
        %613 = vmatprep.subr.bf16.mxu0 0
        %614 = vmatpush1.bf16.msra.mxu0 0
        %615 = vmatprep.subr.bf16.mxu0 0
        %616 = vmatpush1.bf16.msra.mxu0 0
        %617 = vmatprep.subr.bf16.mxu0 0
        %618 = vmatpush1.bf16.msra.mxu0 0
        %619 = vmatprep.subr.bf16.mxu0 0
        %620 = vmatpush1.bf16.msra.mxu0 0
        %621 = vmatprep.subr.bf16.mxu0 0
        %622 = vmatpush1.bf16.msra.mxu0 0
        %623 = vmatprep.subr.bf16.mxu0 0
        %624 = vmatpush1.bf16.msra.mxu0 0
        %625 = vmatprep.mubr.bf16.mxu0 0
        %626 = vmatmul.mubr.bf16.gmra.mrb[0].mxu0 %v278
        %v627 = vpop.f32.mrb[0].mxu0
        %v628 = vadd.f32 %v531, %v627
        %v629 = vpop.f32.mrb[0].mxu0
        %v630 = vpop.f32.mrb[0].mxu0
        %v631 = vadd.f32 %v534, %v630
        %v632 = vpop.f32.mrb[0].mxu0
        %633 = vmatprep.mubr.bf16.mxu0 0
        %634 = vmatmul.mubr.bf16.gmra.mrb[0].mxu0 %v279
        %v635 = vpop.f32.mrb[0].mxu0
        %v636 = vadd.f32 %v539, %v635
        %v637 = vpop.f32.mrb[0].mxu0
        %v638 = vpop.f32.mrb[0].mxu0
        %v639 = vadd.f32 %v542, %v638
        %v640 = vpop.f32.mrb[0].mxu0
        %641 = vmatprep.mubr.bf16.mxu0 0
        %642 = vmatmul.mubr.bf16.gmra.mrb[0].mxu0 %v280
        %v643 = vpop.f32.mrb[0].mxu0
        %v644 = vadd.f32 %v547, %v643
        %v645 = vpop.f32.mrb[0].mxu0
        %v646 = vpop.f32.mrb[0].mxu0
        %v647 = vadd.f32 %v550, %v646
        %v648 = vpop.f32.mrb[0].mxu0
        %649 = vmatprep.mubr.bf16.mxu0 0
        %650 = vmatmul.mubr.bf16.gmra.mrb[0].mxu0 %v281
        %v651 = vpop.f32.mrb[0].mxu0
        %v652 = vadd.f32 %v555, %v651
        %v653 = vpop.f32.mrb[0].mxu0
        %v654 = vpop.f32.mrb[0].mxu0
        %v655 = vadd.f32 %v558, %v654
        %v656 = vpop.f32.mrb[0].mxu0
        %657 = vmatprep.mubr.bf16.mxu0 0
        %658 = vmatmul.mubr.bf16.gmra.mrb[0].mxu0 %v282
        %v659 = vpop.f32.mrb[0].mxu0
        %v660 = vadd.f32 %v563, %v659
        %v661 = vpop.f32.mrb[0].mxu0
        %v662 = vpop.f32.mrb[0].mxu0
        %v663 = vadd.f32 %v566, %v662
        %v664 = vpop.f32.mrb[0].mxu0
        %665 = vmatprep.mubr.bf16.mxu0 0
        %666 = vmatmul.mubr.bf16.gmra.mrb[0].mxu0 %v283
        %v667 = vpop.f32.mrb[0].mxu0
        %v668 = vadd.f32 %v571, %v667
        %v669 = vpop.f32.mrb[0].mxu0
        %v670 = vpop.f32.mrb[0].mxu0
        %v671 = vadd.f32 %v574, %v670
        %v672 = vpop.f32.mrb[0].mxu0
        %673 = vmatprep.mubr.bf16.mxu0 0
        %674 = vmatmul.mubr.bf16.gmra.mrb[0].mxu0 %v296
        %v675 = vpop.f32.mrb[0].mxu0
        %v676 = vadd.f32 %v579, %v675
        %v677 = vpop.f32.mrb[0].mxu0
        %v678 = vpop.f32.mrb[0].mxu0
        %v679 = vadd.f32 %v582, %v678
        %v680 = vpop.f32.mrb[0].mxu0
        %681 = vmatprep.mubr.bf16.mxu0 0
        %682 = vmatmul.mubr.bf16.gmra.mrb[0].mxu0 %v302
        %v683 = vpop.f32.mrb[0].mxu0
        %v684 = vadd.f32 %v587, %v683
        %v685 = vpop.f32.mrb[0].mxu0
        %v686 = vpop.f32.mrb[0].mxu0
        %v687 = vadd.f32 %v590, %v686
        %v688 = vpop.f32.mrb[0].mxu0
        %689 = vdwg.mxu0
        %690 = vst [vmem:[#allocation2] sm:$0xff] %v628
        %691 = vst [vmem:[#allocation2 + $0x8] sm:$0xff] %v631
        %692 = vst [vmem:[#allocation2 + $0x10] sm:$0xff] %v636
        %693 = vst [vmem:[#allocation2 + $0x18] sm:$0xff] %v639
        %694 = vst [vmem:[#allocation2 + $0x20] sm:$0xff] %v644
        %695 = vst [vmem:[#allocation2 + $0x28] sm:$0xff] %v647
        %696 = vst [vmem:[#allocation2 + $0x30] sm:$0xff] %v652
        %697 = vst [vmem:[#allocation2 + $0x38] sm:$0xff] %v655
        %698 = vst [vmem:[#allocation2 + $0x40] sm:$0xff] %v660
        %699 = vst [vmem:[#allocation2 + $0x48] sm:$0xff] %v663
        %700 = vst [vmem:[#allocation2 + $0x50] sm:$0xff] %v668
        %701 = vst [vmem:[#allocation2 + $0x58] sm:$0xff] %v671
        %702 = vst [vmem:[#allocation2 + $0x60] sm:$0xff] %v676
        %703 = vst [vmem:[#allocation2 + $0x68] sm:$0xff] %v679
        %704 = vst [vmem:[#allocation2 + $0x70] sm:$0xff] %v684
        %705 = vst [vmem:[#allocation2 + $0x78] sm:$0xff] %v687
        %v706 = vld [vmem:[%s195] sm:$0xf]
        %v707 = vld [vmem:[%s195 + $0x4] sm:$0xf]
        %v708 = vld [vmem:[%s195 + $0x8] sm:$0x1]
        %v709 = vld [vmem:[%s195 + $0xc] sm:$0xf]
        %v710 = vld [vmem:[%s195 + $0x10] sm:$0xf]
        %v711 = vld [vmem:[%s195 + $0x14] sm:$0x1]
        %v712 = vld [vmem:[%s195 + $0x18] sm:$0xf]
        %v713 = vld [vmem:[%s195 + $0x1c] sm:$0xf]
        %v714 = vld [vmem:[%s195 + $0x20] sm:$0x1]
        %v715 = vld [vmem:[%s195 + $0x24] sm:$0xf]
        %v716 = vld [vmem:[%s195 + $0x28] sm:$0xf]
        %v717 = vld [vmem:[%s195 + $0x2c] sm:$0x1]
        %v718 = vld [vmem:[%s195 + $0x30] sm:$0xf]
        %v719 = vld [vmem:[%s195 + $0x34] sm:$0xf]
        %v720 = vld [vmem:[%s195 + $0x38] sm:$0x1]
        %v721 = vld [vmem:[%s195 + $0x3c] sm:$0xf]
        %v722 = vld [vmem:[%s195 + $0x40] sm:$0xf]
        %v723 = vld [vmem:[%s195 + $0x44] sm:$0x1]
        %v724 = vld [vmem:[%s195 + $0x48] sm:$0xf]
        %v725 = vld [vmem:[%s195 + $0x4c] sm:$0xf]
        %v726 = vld [vmem:[%s195 + $0x50] sm:$0x1]
        %v727 = vld [vmem:[%s195 + $0x54] sm:$0xf]
        %v728 = vld [vmem:[%s195 + $0x58] sm:$0xf]
        %v729 = vld [vmem:[%s195 + $0x5c] sm:$0x1]
        %v730 = vld [vmem:[%s195 + $0x60] sm:$0xf]
        %v731 = vld [vmem:[%s195 + $0x64] sm:$0xf]
        %v732 = vld [vmem:[%s195 + $0x68] sm:$0x1]
        %v733 = vld [vmem:[%s195 + $0x6c] sm:$0xf]
        %v734 = vld [vmem:[%s195 + $0x70] sm:$0xf]
        %v735 = vld [vmem:[%s195 + $0x74] sm:$0x1]
        %v760 = vunpack.c.l.b16 %v706
        %v761 = vunpack.c.l.b16 %v707
        %v762 = vunpack.c.l.b16 %v708
        %v763 = vunpack.c.l.b16 %v709
        %v764 = vunpack.c.l.b16 %v710
        %v765 = vunpack.c.l.b16 %v711
        %v766 = vunpack.c.l.b16 %v712
        %v767 = vunpack.c.l.b16 %v713
        %v768 = vunpack.c.l.b16 %v714
        %v769 = vunpack.c.l.b16 %v715
        %v770 = vunpack.c.l.b16 %v716
        %v771 = vunpack.c.l.b16 %v717
        %v772 = vunpack.c.l.b16 %v718
        %v773 = vunpack.c.l.b16 %v719
        %v774 = vunpack.c.l.b16 %v720
        %v775 = vunpack.c.l.b16 %v721
        %v776 = vunpack.c.l.b16 %v722
        %v777 = vunpack.c.l.b16 %v723
        %v778 = vunpack.c.l.b16 %v724
        %v779 = vunpack.c.l.b16 %v725
        %v780 = vunpack.c.l.b16 %v726
        %v781 = vunpack.c.l.b16 %v727
        %v782 = vunpack.c.l.b16 %v728
        %v783 = vunpack.c.l.b16 %v729
        %v784 = vpack.c.b16 %v761, %v760
        %v785 = vpack.c.b16 %v762, %v762
        %v786 = vpack.c.b16 %v764, %v763
        %v787 = vpack.c.b16 %v765, %v765
        %v788 = vpack.c.b16 %v767, %v766
        %v789 = vpack.c.b16 %v768, %v768
        %v790 = vpack.c.b16 %v770, %v769
        %v791 = vpack.c.b16 %v771, %v771
        %v792 = vpack.c.b16 %v773, %v772
        %v793 = vpack.c.b16 %v774, %v774
        %v794 = vpack.c.b16 %v776, %v775
        %v795 = vpack.c.b16 %v777, %v777
        %v796 = vpack.c.b16 %v779, %v778
        %v797 = vpack.c.b16 %v780, %v780
        %v798 = vpack.c.b16 %v782, %v781
        %v799 = vpack.c.b16 %v783, %v783
        %v803 = vunpack.c.l.b16 %v730
        %v804 = vunpack.c.l.b16 %v731
        %v805 = vunpack.c.l.b16 %v732
        %v806 = vpack.c.b16 %v804, %v803
        %v807 = vpack.c.b16 %v805, %v805
        %v811 = vunpack.c.l.b16 %v733
        %v812 = vunpack.c.l.b16 %v734
        %v813 = vunpack.c.l.b16 %v735
        %v814 = vpack.c.b16 %v812, %v811
        %v815 = vpack.c.b16 %v813, %v813
        %vm816 = vsmask.f32 7424
        %v818 = vshrl.u32 %v784, 16
        %v820 = vshll.u32 %v784, 16
        %v822 = vrot.slane %v820, 1
        %v823 = vor.u32 %v818, %v822
        %v825 = vshll.u32 %v785, 16
        %v827 = vrot.slane %v825, 1
        %v828 = vsel %vm816, %v823, %v827
        %v830 = vshrl.u32 %v786, 16
        %v832 = vshll.u32 %v786, 16
        %v834 = vrot.slane %v832, 1
        %v835 = vor.u32 %v830, %v834
        %v837 = vshll.u32 %v787, 16
        %v839 = vrot.slane %v837, 1
        %v840 = vsel %vm816, %v835, %v839
        %v842 = vshrl.u32 %v788, 16
        %v844 = vshll.u32 %v788, 16
        %v846 = vrot.slane %v844, 1
        %v847 = vor.u32 %v842, %v846
        %v849 = vshll.u32 %v789, 16
        %v851 = vrot.slane %v849, 1
        %v852 = vsel %vm816, %v847, %v851
        %v854 = vshrl.u32 %v790, 16
        %v856 = vshll.u32 %v790, 16
        %v858 = vrot.slane %v856, 1
        %v859 = vor.u32 %v854, %v858
        %v861 = vshll.u32 %v791, 16
        %v863 = vrot.slane %v861, 1
        %v864 = vsel %vm816, %v859, %v863
        %v866 = vshrl.u32 %v792, 16
        %v868 = vshll.u32 %v792, 16
        %v870 = vrot.slane %v868, 1
        %v871 = vor.u32 %v866, %v870
        %v873 = vshll.u32 %v793, 16
        %v875 = vrot.slane %v873, 1
        %v876 = vsel %vm816, %v871, %v875
        %v878 = vshrl.u32 %v794, 16
        %v880 = vshll.u32 %v794, 16
        %v882 = vrot.slane %v880, 1
        %v883 = vor.u32 %v878, %v882
        %v885 = vshll.u32 %v795, 16
        %v887 = vrot.slane %v885, 1
        %v888 = vsel %vm816, %v883, %v887
        %v890 = vshrl.u32 %v796, 16
        %v892 = vshll.u32 %v796, 16
        %v894 = vrot.slane %v892, 1
        %v895 = vor.u32 %v890, %v894
        %v897 = vshll.u32 %v797, 16
        %v899 = vrot.slane %v897, 1
        %v900 = vsel %vm816, %v895, %v899
        %v902 = vshrl.u32 %v798, 16
        %v904 = vshll.u32 %v798, 16
        %v906 = vrot.slane %v904, 1
        %v907 = vor.u32 %v902, %v906
        %v909 = vshll.u32 %v799, 16
        %v911 = vrot.slane %v909, 1
        %v912 = vsel %vm816, %v907, %v911
        %v914 = vshrl.u32 %v806, 16
        %v916 = vshll.u32 %v806, 16
        %v918 = vrot.slane %v916, 1
        %v919 = vor.u32 %v914, %v918
        %v921 = vshll.u32 %v807, 16
        %v923 = vrot.slane %v921, 1
        %v924 = vsel %vm816, %v919, %v923
        %v926 = vshrl.u32 %v814, 16
        %v928 = vshll.u32 %v814, 16
        %v930 = vrot.slane %v928, 1
        %v931 = vor.u32 %v926, %v930
        %v933 = vshll.u32 %v815, 16
        %v935 = vrot.slane %v933, 1
        %v936 = vsel %vm816, %v931, %v935
        %s947 = scalar_lea.vmem [#allocation6], 192
        %v948 = vld [vmem:[%s947] sm:$0xf]
        %v949 = vld [vmem:[%s947 + $0x4] sm:$0xf]
        %v950 = vld [vmem:[%s947 + $0x8] sm:$0xf]
        %v951 = vld [vmem:[%s947 + $0xc] sm:$0xf]
        %v952 = vld [vmem:[%s947 + $0x10] sm:$0xf]
        %v953 = vld [vmem:[%s947 + $0x14] sm:$0xf]
        %v954 = vld [vmem:[%s947 + $0x18] sm:$0xf]
        %v955 = vld [vmem:[%s947 + $0x1c] sm:$0xf]
        %v956 = vld [vmem:[%s947 + $0x20] sm:$0xf]
        %v957 = vld [vmem:[%s947 + $0x24] sm:$0xf]
        %v958 = vld [vmem:[%s947 + $0x28] sm:$0xf]
        %v959 = vld [vmem:[%s947 + $0x2c] sm:$0xf]
        %v960 = vld [vmem:[%s947 + $0x30] sm:$0xf]
        %v961 = vld [vmem:[%s947 + $0x34] sm:$0xf]
        %v962 = vld [vmem:[%s947 + $0x38] sm:$0xf]
        %v963 = vld [vmem:[%s947 + $0x3c] sm:$0xf]
        %v964 = vld [vmem:[%s947 + $0x40] sm:$0xf]
        %v965 = vld [vmem:[%s947 + $0x44] sm:$0xf]
        %v966 = vld [vmem:[%s947 + $0x48] sm:$0xf]
        %v967 = vld [vmem:[%s947 + $0x4c] sm:$0xf]
        %v968 = vld [vmem:[%s947 + $0x50] sm:$0xf]
        %v969 = vld [vmem:[%s947 + $0x54] sm:$0xf]
        %v970 = vld [vmem:[%s947 + $0x58] sm:$0xf]
        %v971 = vld [vmem:[%s947 + $0x5c] sm:$0xf]
        %v972 = vld [vmem:[%s947 + $0x60] sm:$0xf]
        %v973 = vld [vmem:[%s947 + $0x64] sm:$0xf]
        %v974 = vld [vmem:[%s947 + $0x68] sm:$0xf]
        %v975 = vld [vmem:[%s947 + $0x6c] sm:$0xf]
        %v976 = vld [vmem:[%s947 + $0x70] sm:$0xf]
        %v977 = vld [vmem:[%s947 + $0x74] sm:$0xf]
        %v978 = vld [vmem:[%s947 + $0x78] sm:$0xf]
        %v979 = vld [vmem:[%s947 + $0x7c] sm:$0xf]
        %v980 = vld [vmem:[%s947 + $0x80] sm:$0xf]
        %v981 = vld [vmem:[%s947 + $0x84] sm:$0xf]
        %v982 = vld [vmem:[%s947 + $0x88] sm:$0xf]
        %v983 = vld [vmem:[%s947 + $0x8c] sm:$0xf]
        %v984 = vld [vmem:[%s947 + $0x90] sm:$0xf]
        %v985 = vld [vmem:[%s947 + $0x94] sm:$0xf]
        %v986 = vld [vmem:[%s947 + $0x98] sm:$0xf]
        %v987 = vld [vmem:[%s947 + $0x9c] sm:$0xf]
        %v988 = vld [vmem:[%s947 + $0xa0] sm:$0xf]
        %v989 = vld [vmem:[%s947 + $0xa4] sm:$0xf]
        %v990 = vld [vmem:[%s947 + $0xa8] sm:$0xf]
        %v991 = vld [vmem:[%s947 + $0xac] sm:$0xf]
        %v992 = vld [vmem:[%s947 + $0xb0] sm:$0xf]
        %v993 = vld [vmem:[%s947 + $0xb4] sm:$0xf]
        %v994 = vld [vmem:[%s947 + $0xb8] sm:$0xf]
        %v995 = vld [vmem:[%s947 + $0xbc] sm:$0xf]
        %v1044 = vunpack.c.l.b16 %v948
        %v1045 = vunpack.c.l.b16 %v949
        %v1046 = vunpack.c.l.b16 %v950
        %v1047 = vunpack.c.l.b16 %v951
        %v1048 = vunpack.c.l.b16 %v952
        %v1049 = vunpack.c.l.b16 %v953
        %v1050 = vunpack.c.l.b16 %v954
        %v1051 = vunpack.c.l.b16 %v955
        %v1052 = vunpack.c.l.b16 %v956
        %v1053 = vunpack.c.l.b16 %v957
        %v1054 = vunpack.c.l.b16 %v958
        %v1055 = vunpack.c.l.b16 %v959
        %v1056 = vunpack.c.l.b16 %v960
        %v1057 = vunpack.c.l.b16 %v961
        %v1058 = vunpack.c.l.b16 %v962
        %v1059 = vunpack.c.l.b16 %v963
        %v1060 = vunpack.c.l.b16 %v964
        %v1061 = vunpack.c.l.b16 %v965
        %v1062 = vunpack.c.l.b16 %v966
        %v1063 = vunpack.c.l.b16 %v967
        %v1064 = vunpack.c.l.b16 %v968
        %v1065 = vunpack.c.l.b16 %v969
        %v1066 = vunpack.c.l.b16 %v970
        %v1067 = vunpack.c.l.b16 %v971
        %v1068 = vunpack.c.l.b16 %v972
        %v1069 = vunpack.c.l.b16 %v973
        %v1070 = vunpack.c.l.b16 %v974
        %v1071 = vunpack.c.l.b16 %v975
        %v1072 = vunpack.c.l.b16 %v976
        %v1073 = vunpack.c.l.b16 %v977
        %v1074 = vunpack.c.l.b16 %v978
        %v1075 = vunpack.c.l.b16 %v979
        %v1076 = vunpack.c.l.b16 %v980
        %v1077 = vunpack.c.l.b16 %v981
        %v1078 = vunpack.c.l.b16 %v982
        %v1079 = vunpack.c.l.b16 %v983
        %v1080 = vunpack.c.l.b16 %v984
        %v1081 = vunpack.c.l.b16 %v985
        %v1082 = vunpack.c.l.b16 %v986
        %v1083 = vunpack.c.l.b16 %v987
        %v1084 = vunpack.c.l.b16 %v988
        %v1085 = vunpack.c.l.b16 %v989
        %v1086 = vunpack.c.l.b16 %v990
        %v1087 = vunpack.c.l.b16 %v991
        %v1088 = vunpack.c.l.b16 %v992
        %v1089 = vunpack.c.l.b16 %v993
        %v1090 = vunpack.c.l.b16 %v994
        %v1091 = vunpack.c.l.b16 %v995
        %v1092 = vpack.c.b16 %v1045, %v1044
        %v1093 = vpack.c.b16 %v1047, %v1046
        %v1094 = vpack.c.b16 %v1049, %v1048
        %v1095 = vpack.c.b16 %v1051, %v1050
        %v1096 = vpack.c.b16 %v1053, %v1052
        %v1097 = vpack.c.b16 %v1055, %v1054
        %v1098 = vpack.c.b16 %v1057, %v1056
        %v1099 = vpack.c.b16 %v1059, %v1058
        %v1100 = vpack.c.b16 %v1061, %v1060
        %v1101 = vpack.c.b16 %v1063, %v1062
        %v1102 = vpack.c.b16 %v1065, %v1064
        %v1103 = vpack.c.b16 %v1067, %v1066
        %v1104 = vpack.c.b16 %v1069, %v1068
        %v1105 = vpack.c.b16 %v1071, %v1070
        %v1106 = vpack.c.b16 %v1073, %v1072
        %v1107 = vpack.c.b16 %v1075, %v1074
        %v1108 = vpack.c.b16 %v1077, %v1076
        %v1109 = vpack.c.b16 %v1079, %v1078
        %v1110 = vpack.c.b16 %v1081, %v1080
        %v1111 = vpack.c.b16 %v1083, %v1082
        %v1112 = vpack.c.b16 %v1085, %v1084
        %v1113 = vpack.c.b16 %v1087, %v1086
        %v1114 = vpack.c.b16 %v1089, %v1088
        %v1115 = vpack.c.b16 %v1091, %v1090
        %1140 = vmatprep.subr.bf16.mxu0 0
        %1141 = vmatpush1.bf16.msra.mxu0 %v1092
        %1142 = vmatprep.subr.bf16.mxu0 0
        %1143 = vmatpush1.bf16.msra.mxu0 %v1093
        %1144 = vmatprep.subr.bf16.mxu0 0
        %1145 = vmatpush1.bf16.msra.mxu0 %v1094
        %1146 = vmatprep.subr.bf16.mxu0 0
        %1147 = vmatpush1.bf16.msra.mxu0 %v1095
        %1148 = vmatprep.subr.bf16.mxu0 0
        %1149 = vmatpush1.bf16.msra.mxu0 %v1096
        %1150 = vmatprep.subr.bf16.mxu0 0
        %1151 = vmatpush1.bf16.msra.mxu0 %v1097
        %1152 = vmatprep.subr.bf16.mxu0 0
        %1153 = vmatpush1.bf16.msra.mxu0 %v1098
        %1154 = vmatprep.subr.bf16.mxu0 0
        %1155 = vmatpush1.bf16.msra.mxu0 %v1099
        %1156 = vmatprep.subr.bf16.mxu0 0
        %1157 = vmatpush1.bf16.msra.mxu0 %v1100
        %1158 = vmatprep.subr.bf16.mxu0 0
        %1159 = vmatpush1.bf16.msra.mxu0 %v1101
        %1160 = vmatprep.subr.bf16.mxu0 0
        %1161 = vmatpush1.bf16.msra.mxu0 %v1102
        %1162 = vmatprep.subr.bf16.mxu0 0
        %1163 = vmatpush1.bf16.msra.mxu0 %v1103
        %1164 = vmatprep.subr.bf16.mxu0 0
        %1165 = vmatpush1.bf16.msra.mxu0 %v1104
        %1166 = vmatprep.subr.bf16.mxu0 0
        %1167 = vmatpush1.bf16.msra.mxu0 %v1105
        %1168 = vmatprep.subr.bf16.mxu0 0
        %1169 = vmatpush1.bf16.msra.mxu0 %v1106
        %1170 = vmatprep.subr.bf16.mxu0 0
        %1171 = vmatpush1.bf16.msra.mxu0 %v1107
        %1172 = vmatprep.mubr.bf16.mxu0 %v840
        %1173 = vmatmul.mubr.bf16.gmra.mrb[0].mxu0 %v828
        %v1174 = vpop.f32.mrb[0].mxu0
        %v1175 = vadd.f32 0.0, %v1174
        %v1176 = vpop.f32.mrb[0].mxu0
        %v1177 = vpop.f32.mrb[0].mxu0
        %v1178 = vadd.f32 0.0, %v1177
        %v1179 = vpop.f32.mrb[0].mxu0
        %1180 = vmatprep.mubr.bf16.mxu0 %v852
        %1181 = vmatmul.mubr.bf16.gmra.mrb[0].mxu0 %v840
        %v1182 = vpop.f32.mrb[0].mxu0
        %v1183 = vadd.f32 0.0, %v1182
        %v1184 = vpop.f32.mrb[0].mxu0
        %v1185 = vpop.f32.mrb[0].mxu0
        %v1186 = vadd.f32 0.0, %v1185
        %v1187 = vpop.f32.mrb[0].mxu0
        %1188 = vmatprep.mubr.bf16.mxu0 %v864
        %1189 = vmatmul.mubr.bf16.gmra.mrb[0].mxu0 %v852
        %v1190 = vpop.f32.mrb[0].mxu0
        %v1191 = vadd.f32 0.0, %v1190
        %v1192 = vpop.f32.mrb[0].mxu0
        %v1193 = vpop.f32.mrb[0].mxu0
        %v1194 = vadd.f32 0.0, %v1193
        %v1195 = vpop.f32.mrb[0].mxu0
        %1196 = vmatprep.mubr.bf16.mxu0 %v876
        %1197 = vmatmul.mubr.bf16.gmra.mrb[0].mxu0 %v864
        %v1198 = vpop.f32.mrb[0].mxu0
        %v1199 = vadd.f32 0.0, %v1198
        %v1200 = vpop.f32.mrb[0].mxu0
        %v1201 = vpop.f32.mrb[0].mxu0
        %v1202 = vadd.f32 0.0, %v1201
        %v1203 = vpop.f32.mrb[0].mxu0
        %1204 = vmatprep.mubr.bf16.mxu0 %v888
        %1205 = vmatmul.mubr.bf16.gmra.mrb[0].mxu0 %v876
        %v1206 = vpop.f32.mrb[0].mxu0
        %v1207 = vadd.f32 0.0, %v1206
        %v1208 = vpop.f32.mrb[0].mxu0
        %v1209 = vpop.f32.mrb[0].mxu0
        %v1210 = vadd.f32 0.0, %v1209
        %v1211 = vpop.f32.mrb[0].mxu0
        %1212 = vmatprep.mubr.bf16.mxu0 %v900
        %1213 = vmatmul.mubr.bf16.gmra.mrb[0].mxu0 %v888
        %v1214 = vpop.f32.mrb[0].mxu0
        %v1215 = vadd.f32 0.0, %v1214
        %v1216 = vpop.f32.mrb[0].mxu0
        %v1217 = vpop.f32.mrb[0].mxu0
        %v1218 = vadd.f32 0.0, %v1217
        %v1219 = vpop.f32.mrb[0].mxu0
        %1220 = vmatprep.mubr.bf16.mxu0 %v912
        %1221 = vmatmul.mubr.bf16.gmra.mrb[0].mxu0 %v900
        %v1222 = vpop.f32.mrb[0].mxu0
        %v1223 = vadd.f32 0.0, %v1222
        %v1224 = vpop.f32.mrb[0].mxu0
        %v1225 = vpop.f32.mrb[0].mxu0
        %v1226 = vadd.f32 0.0, %v1225
        %v1227 = vpop.f32.mrb[0].mxu0
        %1228 = vmatprep.mubr.bf16.mxu0 %v924
        %1229 = vmatmul.mubr.bf16.gmra.mrb[0].mxu0 %v912
        %v1230 = vpop.f32.mrb[0].mxu0
        %v1231 = vadd.f32 0.0, %v1230
        %v1232 = vpop.f32.mrb[0].mxu0
        %v1233 = vpop.f32.mrb[0].mxu0
        %v1234 = vadd.f32 0.0, %v1233
        %v1235 = vpop.f32.mrb[0].mxu0
        %1236 = vdwg.mxu0
        %1237 = vmatprep.subr.bf16.mxu0 0
        %1238 = vmatpush1.bf16.msra.mxu0 %v1108
        %1239 = vmatprep.subr.bf16.mxu0 0
        %1240 = vmatpush1.bf16.msra.mxu0 %v1109
        %1241 = vmatprep.subr.bf16.mxu0 0
        %1242 = vmatpush1.bf16.msra.mxu0 %v1110
        %1243 = vmatprep.subr.bf16.mxu0 0
        %1244 = vmatpush1.bf16.msra.mxu0 %v1111
        %1245 = vmatprep.subr.bf16.mxu0 0
        %1246 = vmatpush1.bf16.msra.mxu0 %v1112
        %1247 = vmatprep.subr.bf16.mxu0 0
        %1248 = vmatpush1.bf16.msra.mxu0 %v1113
        %1249 = vmatprep.subr.bf16.mxu0 0
        %1250 = vmatpush1.bf16.msra.mxu0 %v1114
        %1251 = vmatprep.subr.bf16.mxu0 0
        %1252 = vmatpush1.bf16.msra.mxu0 %v1115
        %1253 = vmatprep.subr.bf16.mxu0 0
        %1254 = vmatpush1.bf16.msra.mxu0 0
        %1255 = vmatprep.subr.bf16.mxu0 0
        %1256 = vmatpush1.bf16.msra.mxu0 0
        %1257 = vmatprep.subr.bf16.mxu0 0
        %1258 = vmatpush1.bf16.msra.mxu0 0
        %1259 = vmatprep.subr.bf16.mxu0 0
        %1260 = vmatpush1.bf16.msra.mxu0 0
        %1261 = vmatprep.subr.bf16.mxu0 0
        %1262 = vmatpush1.bf16.msra.mxu0 0
        %1263 = vmatprep.subr.bf16.mxu0 0
        %1264 = vmatpush1.bf16.msra.mxu0 0
        %1265 = vmatprep.subr.bf16.mxu0 0
        %1266 = vmatpush1.bf16.msra.mxu0 0
        %1267 = vmatprep.subr.bf16.mxu0 0
        %1268 = vmatpush1.bf16.msra.mxu0 0
        %1269 = vmatprep.mubr.bf16.mxu0 0
        %1270 = vmatmul.mubr.bf16.gmra.mrb[0].mxu0 %v852
        %v1271 = vpop.f32.mrb[0].mxu0
        %v1272 = vadd.f32 %v1175, %v1271
        %v1273 = vpop.f32.mrb[0].mxu0
        %v1274 = vpop.f32.mrb[0].mxu0
        %v1275 = vadd.f32 %v1178, %v1274
        %v1276 = vpop.f32.mrb[0].mxu0
        %1277 = vmatprep.mubr.bf16.mxu0 0
        %1278 = vmatmul.mubr.bf16.gmra.mrb[0].mxu0 %v864
        %v1279 = vpop.f32.mrb[0].mxu0
        %v1280 = vadd.f32 %v1183, %v1279
        %v1281 = vpop.f32.mrb[0].mxu0
        %v1282 = vpop.f32.mrb[0].mxu0
        %v1283 = vadd.f32 %v1186, %v1282
        %v1284 = vpop.f32.mrb[0].mxu0
        %1285 = vmatprep.mubr.bf16.mxu0 0
        %1286 = vmatmul.mubr.bf16.gmra.mrb[0].mxu0 %v876
        %v1287 = vpop.f32.mrb[0].mxu0
        %v1288 = vadd.f32 %v1191, %v1287
        %v1289 = vpop.f32.mrb[0].mxu0
        %v1290 = vpop.f32.mrb[0].mxu0
        %v1291 = vadd.f32 %v1194, %v1290
        %v1292 = vpop.f32.mrb[0].mxu0
        %1293 = vmatprep.mubr.bf16.mxu0 0
        %1294 = vmatmul.mubr.bf16.gmra.mrb[0].mxu0 %v888
        %v1295 = vpop.f32.mrb[0].mxu0
        %v1296 = vadd.f32 %v1199, %v1295
        %v1297 = vpop.f32.mrb[0].mxu0
        %v1298 = vpop.f32.mrb[0].mxu0
        %v1299 = vadd.f32 %v1202, %v1298
        %v1300 = vpop.f32.mrb[0].mxu0
        %1301 = vmatprep.mubr.bf16.mxu0 0
        %1302 = vmatmul.mubr.bf16.gmra.mrb[0].mxu0 %v900
        %v1303 = vpop.f32.mrb[0].mxu0
        %v1304 = vadd.f32 %v1207, %v1303
        %v1305 = vpop.f32.mrb[0].mxu0
        %v1306 = vpop.f32.mrb[0].mxu0
        %v1307 = vadd.f32 %v1210, %v1306
        %v1308 = vpop.f32.mrb[0].mxu0
        %1309 = vmatprep.mubr.bf16.mxu0 0
        %1310 = vmatmul.mubr.bf16.gmra.mrb[0].mxu0 %v912
        %v1311 = vpop.f32.mrb[0].mxu0
        %v1312 = vadd.f32 %v1215, %v1311
        %v1313 = vpop.f32.mrb[0].mxu0
        %v1314 = vpop.f32.mrb[0].mxu0
        %v1315 = vadd.f32 %v1218, %v1314
        %v1316 = vpop.f32.mrb[0].mxu0
        %1317 = vmatprep.mubr.bf16.mxu0 0
        %1318 = vmatmul.mubr.bf16.gmra.mrb[0].mxu0 %v924
        %v1319 = vpop.f32.mrb[0].mxu0
        %v1320 = vadd.f32 %v1223, %v1319
        %v1321 = vpop.f32.mrb[0].mxu0
        %v1322 = vpop.f32.mrb[0].mxu0
        %v1323 = vadd.f32 %v1226, %v1322
        %v1324 = vpop.f32.mrb[0].mxu0
        %1325 = vmatprep.mubr.bf16.mxu0 0
        %1326 = vmatmul.mubr.bf16.gmra.mrb[0].mxu0 %v936
        %v1327 = vpop.f32.mrb[0].mxu0
        %v1328 = vadd.f32 %v1231, %v1327
        %v1329 = vpop.f32.mrb[0].mxu0
        %v1330 = vpop.f32.mrb[0].mxu0
        %v1331 = vadd.f32 %v1234, %v1330
        %v1332 = vpop.f32.mrb[0].mxu0
        %1333 = vdwg.mxu0
        %v1334 = vld [vmem:[#allocation2] sm:$0xff]
        %v1335 = vld [vmem:[#allocation2 + $0x8] sm:$0xff]
        %v1336 = vld [vmem:[#allocation2 + $0x10] sm:$0xff]
        %v1337 = vld [vmem:[#allocation2 + $0x18] sm:$0xff]
        %v1338 = vld [vmem:[#allocation2 + $0x20] sm:$0xff]
        %v1339 = vld [vmem:[#allocation2 + $0x28] sm:$0xff]
        %v1340 = vld [vmem:[#allocation2 + $0x30] sm:$0xff]
        %v1341 = vld [vmem:[#allocation2 + $0x38] sm:$0xff]
        %v1342 = vld [vmem:[#allocation2 + $0x40] sm:$0xff]
        %v1343 = vld [vmem:[#allocation2 + $0x48] sm:$0xff]
        %v1344 = vld [vmem:[#allocation2 + $0x50] sm:$0xff]
        %v1345 = vld [vmem:[#allocation2 + $0x58] sm:$0xff]
        %v1346 = vld [vmem:[#allocation2 + $0x60] sm:$0xff]
        %v1347 = vld [vmem:[#allocation2 + $0x68] sm:$0xff]
        %v1348 = vld [vmem:[#allocation2 + $0x70] sm:$0xff]
        %v1349 = vld [vmem:[#allocation2 + $0x78] sm:$0xff]
        %v1350 = vadd.f32 %v1334, %v1272
        %v1351 = vadd.f32 %v1335, %v1275
        %v1352 = vadd.f32 %v1336, %v1280
        %v1353 = vadd.f32 %v1337, %v1283
        %v1354 = vadd.f32 %v1338, %v1288
        %v1355 = vadd.f32 %v1339, %v1291
        %v1356 = vadd.f32 %v1340, %v1296
        %v1357 = vadd.f32 %v1341, %v1299
        %v1358 = vadd.f32 %v1342, %v1304
        %v1359 = vadd.f32 %v1343, %v1307
        %v1360 = vadd.f32 %v1344, %v1312
        %v1361 = vadd.f32 %v1345, %v1315
        %v1362 = vadd.f32 %v1346, %v1320
        %v1363 = vadd.f32 %v1347, %v1323
        %v1364 = vadd.f32 %v1348, %v1328
        %v1365 = vadd.f32 %v1349, %v1331
        %1366 = vst [vmem:[#allocation2] sm:$0xff] %v1350
        %1367 = vst [vmem:[#allocation2 + $0x8] sm:$0xff] %v1351
        %1368 = vst [vmem:[#allocation2 + $0x10] sm:$0xff] %v1352
        %1369 = vst [vmem:[#allocation2 + $0x18] sm:$0xff] %v1353
        %1370 = vst [vmem:[#allocation2 + $0x20] sm:$0xff] %v1354
        %1371 = vst [vmem:[#allocation2 + $0x28] sm:$0xff] %v1355
        %1372 = vst [vmem:[#allocation2 + $0x30] sm:$0xff] %v1356
        %1373 = vst [vmem:[#allocation2 + $0x38] sm:$0xff] %v1357
        %1374 = vst [vmem:[#allocation2 + $0x40] sm:$0xff] %v1358
        %1375 = vst [vmem:[#allocation2 + $0x48] sm:$0xff] %v1359
        %1376 = vst [vmem:[#allocation2 + $0x50] sm:$0xff] %v1360
        %1377 = vst [vmem:[#allocation2 + $0x58] sm:$0xff] %v1361
        %1378 = vst [vmem:[#allocation2 + $0x60] sm:$0xff] %v1362
        %1379 = vst [vmem:[#allocation2 + $0x68] sm:$0xff] %v1363
        %1380 = vst [vmem:[#allocation2 + $0x70] sm:$0xff] %v1364
        %1381 = vst [vmem:[#allocation2 + $0x78] sm:$0xff] %v1365
        %v1382 = vld [vmem:[%s195] sm:$0xe]
        %v1383 = vld [vmem:[%s195 + $0x4] sm:$0xf]
        %v1384 = vld [vmem:[%s195 + $0x8] sm:$0x1]
        %v1385 = vld [vmem:[%s195 + $0xc] sm:$0xe]
        %v1386 = vld [vmem:[%s195 + $0x10] sm:$0xf]
        %v1387 = vld [vmem:[%s195 + $0x14] sm:$0x1]
        %v1388 = vld [vmem:[%s195 + $0x18] sm:$0xe]
        %v1389 = vld [vmem:[%s195 + $0x1c] sm:$0xf]
        %v1390 = vld [vmem:[%s195 + $0x20] sm:$0x1]
        %v1391 = vld [vmem:[%s195 + $0x24] sm:$0xe]
        %v1392 = vld [vmem:[%s195 + $0x28] sm:$0xf]
        %v1393 = vld [vmem:[%s195 + $0x2c] sm:$0x1]
        %v1394 = vld [vmem:[%s195 + $0x30] sm:$0xe]
        %v1395 = vld [vmem:[%s195 + $0x34] sm:$0xf]
        %v1396 = vld [vmem:[%s195 + $0x38] sm:$0x1]
        %v1397 = vld [vmem:[%s195 + $0x3c] sm:$0xe]
        %v1398 = vld [vmem:[%s195 + $0x40] sm:$0xf]
        %v1399 = vld [vmem:[%s195 + $0x44] sm:$0x1]
        %v1400 = vld [vmem:[%s195 + $0x48] sm:$0xe]
        %v1401 = vld [vmem:[%s195 + $0x4c] sm:$0xf]
        %v1402 = vld [vmem:[%s195 + $0x50] sm:$0x1]
        %v1403 = vld [vmem:[%s195 + $0x54] sm:$0xe]
        %v1404 = vld [vmem:[%s195 + $0x58] sm:$0xf]
        %v1405 = vld [vmem:[%s195 + $0x5c] sm:$0x1]
        %v1406 = vld [vmem:[%s195 + $0x60] sm:$0xe]
        %v1407 = vld [vmem:[%s195 + $0x64] sm:$0xf]
        %v1408 = vld [vmem:[%s195 + $0x68] sm:$0x1]
        %v1409 = vld [vmem:[%s195 + $0x6c] sm:$0xe]
        %v1410 = vld [vmem:[%s195 + $0x70] sm:$0xf]
        %v1411 = vld [vmem:[%s195 + $0x74] sm:$0x1]
        %v1436 = vunpack.c.l.b16 %v1382
        %v1437 = vunpack.c.l.b16 %v1383
        %v1438 = vunpack.c.l.b16 %v1384
        %v1439 = vunpack.c.l.b16 %v1385
        %v1440 = vunpack.c.l.b16 %v1386
        %v1441 = vunpack.c.l.b16 %v1387
        %v1442 = vunpack.c.l.b16 %v1388
        %v1443 = vunpack.c.l.b16 %v1389
        %v1444 = vunpack.c.l.b16 %v1390
        %v1445 = vunpack.c.l.b16 %v1391
        %v1446 = vunpack.c.l.b16 %v1392
        %v1447 = vunpack.c.l.b16 %v1393
        %v1448 = vunpack.c.l.b16 %v1394
        %v1449 = vunpack.c.l.b16 %v1395
        %v1450 = vunpack.c.l.b16 %v1396
        %v1451 = vunpack.c.l.b16 %v1397
        %v1452 = vunpack.c.l.b16 %v1398
        %v1453 = vunpack.c.l.b16 %v1399
        %v1454 = vunpack.c.l.b16 %v1400
        %v1455 = vunpack.c.l.b16 %v1401
        %v1456 = vunpack.c.l.b16 %v1402
        %v1457 = vunpack.c.l.b16 %v1403
        %v1458 = vunpack.c.l.b16 %v1404
        %v1459 = vunpack.c.l.b16 %v1405
        %v1460 = vpack.c.b16 %v1437, %v1436
        %v1461 = vpack.c.b16 %v1438, %v1438
        %v1462 = vpack.c.b16 %v1440, %v1439
        %v1463 = vpack.c.b16 %v1441, %v1441
        %v1464 = vpack.c.b16 %v1443, %v1442
        %v1465 = vpack.c.b16 %v1444, %v1444
        %v1466 = vpack.c.b16 %v1446, %v1445
        %v1467 = vpack.c.b16 %v1447, %v1447
        %v1468 = vpack.c.b16 %v1449, %v1448
        %v1469 = vpack.c.b16 %v1450, %v1450
        %v1470 = vpack.c.b16 %v1452, %v1451
        %v1471 = vpack.c.b16 %v1453, %v1453
        %v1472 = vpack.c.b16 %v1455, %v1454
        %v1473 = vpack.c.b16 %v1456, %v1456
        %v1474 = vpack.c.b16 %v1458, %v1457
        %v1475 = vpack.c.b16 %v1459, %v1459
        %v1479 = vunpack.c.l.b16 %v1406
        %v1480 = vunpack.c.l.b16 %v1407
        %v1481 = vunpack.c.l.b16 %v1408
        %v1482 = vpack.c.b16 %v1480, %v1479
        %v1483 = vpack.c.b16 %v1481, %v1481
        %v1487 = vunpack.c.l.b16 %v1409
        %v1488 = vunpack.c.l.b16 %v1410
        %v1489 = vunpack.c.l.b16 %v1411
        %v1490 = vpack.c.b16 %v1488, %v1487
        %v1491 = vpack.c.b16 %v1489, %v1489
        %vm1492 = vcmask 1046528
        %v1493 = vrot.slane %v1460, 1
        %v1494 = vrot.slane %v1461, 1
        %v1495 = vsel %vm1492, %v1493, %v1494
        %v1496 = vrot.slane %v1462, 1
        %v1497 = vrot.slane %v1463, 1
        %v1498 = vsel %vm1492, %v1496, %v1497
        %v1499 = vrot.slane %v1464, 1
        %v1500 = vrot.slane %v1465, 1
        %v1501 = vsel %vm1492, %v1499, %v1500
        %v1502 = vrot.slane %v1466, 1
        %v1503 = vrot.slane %v1467, 1
        %v1504 = vsel %vm1492, %v1502, %v1503
        %v1505 = vrot.slane %v1468, 1
        %v1506 = vrot.slane %v1469, 1
        %v1507 = vsel %vm1492, %v1505, %v1506
        %v1508 = vrot.slane %v1470, 1
        %v1509 = vrot.slane %v1471, 1
        %v1510 = vsel %vm1492, %v1508, %v1509
        %v1511 = vrot.slane %v1472, 1
        %v1512 = vrot.slane %v1473, 1
        %v1513 = vsel %vm1492, %v1511, %v1512
        %v1514 = vrot.slane %v1474, 1
        %v1515 = vrot.slane %v1475, 1
        %v1516 = vsel %vm1492, %v1514, %v1515
        %v1517 = vrot.slane %v1482, 1
        %v1518 = vrot.slane %v1483, 1
        %v1519 = vsel %vm1492, %v1517, %v1518
        %v1520 = vrot.slane %v1490, 1
        %v1521 = vrot.slane %v1491, 1
        %v1522 = vsel %vm1492, %v1520, %v1521
        %s1533 = scalar_lea.vmem [#allocation6], 384
        %v1534 = vld [vmem:[%s1533] sm:$0xf]
        %v1535 = vld [vmem:[%s1533 + $0x4] sm:$0xf]
        %v1536 = vld [vmem:[%s1533 + $0x8] sm:$0xf]
        %v1537 = vld [vmem:[%s1533 + $0xc] sm:$0xf]
        %v1538 = vld [vmem:[%s1533 + $0x10] sm:$0xf]
        %v1539 = vld [vmem:[%s1533 + $0x14] sm:$0xf]
        %v1540 = vld [vmem:[%s1533 + $0x18] sm:$0xf]
        %v1541 = vld [vmem:[%s1533 + $0x1c] sm:$0xf]
        %v1542 = vld [vmem:[%s1533 + $0x20] sm:$0xf]
        %v1543 = vld [vmem:[%s1533 + $0x24] sm:$0xf]
        %v1544 = vld [vmem:[%s1533 + $0x28] sm:$0xf]
        %v1545 = vld [vmem:[%s1533 + $0x2c] sm:$0xf]
        %v1546 = vld [vmem:[%s1533 + $0x30] sm:$0xf]
        %v1547 = vld [vmem:[%s1533 + $0x34] sm:$0xf]
        %v1548 = vld [vmem:[%s1533 + $0x38] sm:$0xf]
        %v1549 = vld [vmem:[%s1533 + $0x3c] sm:$0xf]
        %v1550 = vld [vmem:[%s1533 + $0x40] sm:$0xf]
        %v1551 = vld [vmem:[%s1533 + $0x44] sm:$0xf]
        %v1552 = vld [vmem:[%s1533 + $0x48] sm:$0xf]
        %v1553 = vld [vmem:[%s1533 + $0x4c] sm:$0xf]
        %v1554 = vld [vmem:[%s1533 + $0x50] sm:$0xf]
        %v1555 = vld [vmem:[%s1533 + $0x54] sm:$0xf]
        %v1556 = vld [vmem:[%s1533 + $0x58] sm:$0xf]
        %v1557 = vld [vmem:[%s1533 + $0x5c] sm:$0xf]
        %v1558 = vld [vmem:[%s1533 + $0x60] sm:$0xf]
        %v1559 = vld [vmem:[%s1533 + $0x64] sm:$0xf]
        %v1560 = vld [vmem:[%s1533 + $0x68] sm:$0xf]
        %v1561 = vld [vmem:[%s1533 + $0x6c] sm:$0xf]
        %v1562 = vld [vmem:[%s1533 + $0x70] sm:$0xf]
        %v1563 = vld [vmem:[%s1533 + $0x74] sm:$0xf]
        %v1564 = vld [vmem:[%s1533 + $0x78] sm:$0xf]
        %v1565 = vld [vmem:[%s1533 + $0x7c] sm:$0xf]
        %v1566 = vld [vmem:[%s1533 + $0x80] sm:$0xf]
        %v1567 = vld [vmem:[%s1533 + $0x84] sm:$0xf]
        %v1568 = vld [vmem:[%s1533 + $0x88] sm:$0xf]
        %v1569 = vld [vmem:[%s1533 + $0x8c] sm:$0xf]
        %v1570 = vld [vmem:[%s1533 + $0x90] sm:$0xf]
        %v1571 = vld [vmem:[%s1533 + $0x94] sm:$0xf]
        %v1572 = vld [vmem:[%s1533 + $0x98] sm:$0xf]
        %v1573 = vld [vmem:[%s1533 + $0x9c] sm:$0xf]
        %v1574 = vld [vmem:[%s1533 + $0xa0] sm:$0xf]
        %v1575 = vld [vmem:[%s1533 + $0xa4] sm:$0xf]
        %v1576 = vld [vmem:[%s1533 + $0xa8] sm:$0xf]
        %v1577 = vld [vmem:[%s1533 + $0xac] sm:$0xf]
        %v1578 = vld [vmem:[%s1533 + $0xb0] sm:$0xf]
        %v1579 = vld [vmem:[%s1533 + $0xb4] sm:$0xf]
        %v1580 = vld [vmem:[%s1533 + $0xb8] sm:$0xf]
        %v1581 = vld [vmem:[%s1533 + $0xbc] sm:$0xf]
        %v1630 = vunpack.c.l.b16 %v1534
        %v1631 = vunpack.c.l.b16 %v1535
        %v1632 = vunpack.c.l.b16 %v1536
        %v1633 = vunpack.c.l.b16 %v1537
        %v1634 = vunpack.c.l.b16 %v1538
        %v1635 = vunpack.c.l.b16 %v1539
        %v1636 = vunpack.c.l.b16 %v1540
        %v1637 = vunpack.c.l.b16 %v1541
        %v1638 = vunpack.c.l.b16 %v1542
        %v1639 = vunpack.c.l.b16 %v1543
        %v1640 = vunpack.c.l.b16 %v1544
        %v1641 = vunpack.c.l.b16 %v1545
        %v1642 = vunpack.c.l.b16 %v1546
        %v1643 = vunpack.c.l.b16 %v1547
        %v1644 = vunpack.c.l.b16 %v1548
        %v1645 = vunpack.c.l.b16 %v1549
        %v1646 = vunpack.c.l.b16 %v1550
        %v1647 = vunpack.c.l.b16 %v1551
        %v1648 = vunpack.c.l.b16 %v1552
        %v1649 = vunpack.c.l.b16 %v1553
        %v1650 = vunpack.c.l.b16 %v1554
        %v1651 = vunpack.c.l.b16 %v1555
        %v1652 = vunpack.c.l.b16 %v1556
        %v1653 = vunpack.c.l.b16 %v1557
        %v1654 = vunpack.c.l.b16 %v1558
        %v1655 = vunpack.c.l.b16 %v1559
        %v1656 = vunpack.c.l.b16 %v1560
        %v1657 = vunpack.c.l.b16 %v1561
        %v1658 = vunpack.c.l.b16 %v1562
        %v1659 = vunpack.c.l.b16 %v1563
        %v1660 = vunpack.c.l.b16 %v1564
        %v1661 = vunpack.c.l.b16 %v1565
        %v1662 = vunpack.c.l.b16 %v1566
        %v1663 = vunpack.c.l.b16 %v1567
        %v1664 = vunpack.c.l.b16 %v1568
        %v1665 = vunpack.c.l.b16 %v1569
        %v1666 = vunpack.c.l.b16 %v1570
        %v1667 = vunpack.c.l.b16 %v1571
        %v1668 = vunpack.c.l.b16 %v1572
        %v1669 = vunpack.c.l.b16 %v1573
        %v1670 = vunpack.c.l.b16 %v1574
        %v1671 = vunpack.c.l.b16 %v1575
        %v1672 = vunpack.c.l.b16 %v1576
        %v1673 = vunpack.c.l.b16 %v1577
        %v1674 = vunpack.c.l.b16 %v1578
        %v1675 = vunpack.c.l.b16 %v1579
        %v1676 = vunpack.c.l.b16 %v1580
        %v1677 = vunpack.c.l.b16 %v1581
        %v1678 = vpack.c.b16 %v1631, %v1630
        %v1679 = vpack.c.b16 %v1633, %v1632
        %v1680 = vpack.c.b16 %v1635, %v1634
        %v1681 = vpack.c.b16 %v1637, %v1636
        %v1682 = vpack.c.b16 %v1639, %v1638
        %v1683 = vpack.c.b16 %v1641, %v1640
        %v1684 = vpack.c.b16 %v1643, %v1642
        %v1685 = vpack.c.b16 %v1645, %v1644
        %v1686 = vpack.c.b16 %v1647, %v1646
        %v1687 = vpack.c.b16 %v1649, %v1648
        %v1688 = vpack.c.b16 %v1651, %v1650
        %v1689 = vpack.c.b16 %v1653, %v1652
        %v1690 = vpack.c.b16 %v1655, %v1654
        %v1691 = vpack.c.b16 %v1657, %v1656
        %v1692 = vpack.c.b16 %v1659, %v1658
        %v1693 = vpack.c.b16 %v1661, %v1660
        %v1694 = vpack.c.b16 %v1663, %v1662
        %v1695 = vpack.c.b16 %v1665, %v1664
        %v1696 = vpack.c.b16 %v1667, %v1666
        %v1697 = vpack.c.b16 %v1669, %v1668
        %v1698 = vpack.c.b16 %v1671, %v1670
        %v1699 = vpack.c.b16 %v1673, %v1672
        %v1700 = vpack.c.b16 %v1675, %v1674
        %v1701 = vpack.c.b16 %v1677, %v1676
        %1726 = vmatprep.subr.bf16.mxu0 0
        %1727 = vmatpush1.bf16.msra.mxu0 %v1678
        %1728 = vmatprep.subr.bf16.mxu0 0
        %1729 = vmatpush1.bf16.msra.mxu0 %v1679
        %1730 = vmatprep.subr.bf16.mxu0 0
        %1731 = vmatpush1.bf16.msra.mxu0 %v1680
        %1732 = vmatprep.subr.bf16.mxu0 0
        %1733 = vmatpush1.bf16.msra.mxu0 %v1681
        %1734 = vmatprep.subr.bf16.mxu0 0
        %1735 = vmatpush1.bf16.msra.mxu0 %v1682
        %1736 = vmatprep.subr.bf16.mxu0 0
        %1737 = vmatpush1.bf16.msra.mxu0 %v1683
        %1738 = vmatprep.subr.bf16.mxu0 0
        %1739 = vmatpush1.bf16.msra.mxu0 %v1684
        %1740 = vmatprep.subr.bf16.mxu0 0
        %1741 = vmatpush1.bf16.msra.mxu0 %v1685
        %1742 = vmatprep.subr.bf16.mxu0 0
        %1743 = vmatpush1.bf16.msra.mxu0 %v1686
        %1744 = vmatprep.subr.bf16.mxu0 0
        %1745 = vmatpush1.bf16.msra.mxu0 %v1687
        %1746 = vmatprep.subr.bf16.mxu0 0
        %1747 = vmatpush1.bf16.msra.mxu0 %v1688
        %1748 = vmatprep.subr.bf16.mxu0 0
        %1749 = vmatpush1.bf16.msra.mxu0 %v1689
        %1750 = vmatprep.subr.bf16.mxu0 0
        %1751 = vmatpush1.bf16.msra.mxu0 %v1690
        %1752 = vmatprep.subr.bf16.mxu0 0
        %1753 = vmatpush1.bf16.msra.mxu0 %v1691
        %1754 = vmatprep.subr.bf16.mxu0 0
        %1755 = vmatpush1.bf16.msra.mxu0 %v1692
        %1756 = vmatprep.subr.bf16.mxu0 0
        %1757 = vmatpush1.bf16.msra.mxu0 %v1693
        %1758 = vmatprep.mubr.bf16.mxu0 %v1498
        %1759 = vmatmul.mubr.bf16.gmra.mrb[0].mxu0 %v1495
        %v1760 = vpop.f32.mrb[0].mxu0
        %v1761 = vadd.f32 0.0, %v1760
        %v1762 = vpop.f32.mrb[0].mxu0
        %v1763 = vpop.f32.mrb[0].mxu0
        %v1764 = vadd.f32 0.0, %v1763
        %v1765 = vpop.f32.mrb[0].mxu0
        %1766 = vmatprep.mubr.bf16.mxu0 %v1501
        %1767 = vmatmul.mubr.bf16.gmra.mrb[0].mxu0 %v1498
        %v1768 = vpop.f32.mrb[0].mxu0
        %v1769 = vadd.f32 0.0, %v1768
        %v1770 = vpop.f32.mrb[0].mxu0
        %v1771 = vpop.f32.mrb[0].mxu0
        %v1772 = vadd.f32 0.0, %v1771
        %v1773 = vpop.f32.mrb[0].mxu0
        %1774 = vmatprep.mubr.bf16.mxu0 %v1504
        %1775 = vmatmul.mubr.bf16.gmra.mrb[0].mxu0 %v1501
        %v1776 = vpop.f32.mrb[0].mxu0
        %v1777 = vadd.f32 0.0, %v1776
        %v1778 = vpop.f32.mrb[0].mxu0
        %v1779 = vpop.f32.mrb[0].mxu0
        %v1780 = vadd.f32 0.0, %v1779
        %v1781 = vpop.f32.mrb[0].mxu0
        %1782 = vmatprep.mubr.bf16.mxu0 %v1507
        %1783 = vmatmul.mubr.bf16.gmra.mrb[0].mxu0 %v1504
        %v1784 = vpop.f32.mrb[0].mxu0
        %v1785 = vadd.f32 0.0, %v1784
        %v1786 = vpop.f32.mrb[0].mxu0
        %v1787 = vpop.f32.mrb[0].mxu0
        %v1788 = vadd.f32 0.0, %v1787
        %v1789 = vpop.f32.mrb[0].mxu0
        %1790 = vmatprep.mubr.bf16.mxu0 %v1510
        %1791 = vmatmul.mubr.bf16.gmra.mrb[0].mxu0 %v1507
        %v1792 = vpop.f32.mrb[0].mxu0
        %v1793 = vadd.f32 0.0, %v1792
        %v1794 = vpop.f32.mrb[0].mxu0
        %v1795 = vpop.f32.mrb[0].mxu0
        %v1796 = vadd.f32 0.0, %v1795
        %v1797 = vpop.f32.mrb[0].mxu0
        %1798 = vmatprep.mubr.bf16.mxu0 %v1513
        %1799 = vmatmul.mubr.bf16.gmra.mrb[0].mxu0 %v1510
        %v1800 = vpop.f32.mrb[0].mxu0
        %v1801 = vadd.f32 0.0, %v1800
        %v1802 = vpop.f32.mrb[0].mxu0
        %v1803 = vpop.f32.mrb[0].mxu0
        %v1804 = vadd.f32 0.0, %v1803
        %v1805 = vpop.f32.mrb[0].mxu0
        %1806 = vmatprep.mubr.bf16.mxu0 %v1516
        %1807 = vmatmul.mubr.bf16.gmra.mrb[0].mxu0 %v1513
        %v1808 = vpop.f32.mrb[0].mxu0
        %v1809 = vadd.f32 0.0, %v1808
        %v1810 = vpop.f32.mrb[0].mxu0
        %v1811 = vpop.f32.mrb[0].mxu0
        %v1812 = vadd.f32 0.0, %v1811
        %v1813 = vpop.f32.mrb[0].mxu0
        %1814 = vmatprep.mubr.bf16.mxu0 %v1519
        %1815 = vmatmul.mubr.bf16.gmra.mrb[0].mxu0 %v1516
        %v1816 = vpop.f32.mrb[0].mxu0
        %v1817 = vadd.f32 0.0, %v1816
        %v1818 = vpop.f32.mrb[0].mxu0
        %v1819 = vpop.f32.mrb[0].mxu0
        %v1820 = vadd.f32 0.0, %v1819
        %v1821 = vpop.f32.mrb[0].mxu0
        %1822 = vdwg.mxu0
        %1823 = vmatprep.subr.bf16.mxu0 0
        %1824 = vmatpush1.bf16.msra.mxu0 %v1694
        %1825 = vmatprep.subr.bf16.mxu0 0
        %1826 = vmatpush1.bf16.msra.mxu0 %v1695
        %1827 = vmatprep.subr.bf16.mxu0 0
        %1828 = vmatpush1.bf16.msra.mxu0 %v1696
        %1829 = vmatprep.subr.bf16.mxu0 0
        %1830 = vmatpush1.bf16.msra.mxu0 %v1697
        %1831 = vmatprep.subr.bf16.mxu0 0
        %1832 = vmatpush1.bf16.msra.mxu0 %v1698
        %1833 = vmatprep.subr.bf16.mxu0 0
        %1834 = vmatpush1.bf16.msra.mxu0 %v1699
        %1835 = vmatprep.subr.bf16.mxu0 0
        %1836 = vmatpush1.bf16.msra.mxu0 %v1700
        %1837 = vmatprep.subr.bf16.mxu0 0
        %1838 = vmatpush1.bf16.msra.mxu0 %v1701
        %1839 = vmatprep.subr.bf16.mxu0 0
        %1840 = vmatpush1.bf16.msra.mxu0 0
        %1841 = vmatprep.subr.bf16.mxu0 0
        %1842 = vmatpush1.bf16.msra.mxu0 0
        %1843 = vmatprep.subr.bf16.mxu0 0
        %1844 = vmatpush1.bf16.msra.mxu0 0
        %1845 = vmatprep.subr.bf16.mxu0 0
        %1846 = vmatpush1.bf16.msra.mxu0 0
        %1847 = vmatprep.subr.bf16.mxu0 0
        %1848 = vmatpush1.bf16.msra.mxu0 0
        %1849 = vmatprep.subr.bf16.mxu0 0
        %1850 = vmatpush1.bf16.msra.mxu0 0
        %1851 = vmatprep.subr.bf16.mxu0 0
        %1852 = vmatpush1.bf16.msra.mxu0 0
        %1853 = vmatprep.subr.bf16.mxu0 0
        %1854 = vmatpush1.bf16.msra.mxu0 0
        %1855 = vmatprep.mubr.bf16.mxu0 0
        %1856 = vmatmul.mubr.bf16.gmra.mrb[0].mxu0 %v1501
        %v1857 = vpop.f32.mrb[0].mxu0
        %v1858 = vadd.f32 %v1761, %v1857
        %v1859 = vpop.f32.mrb[0].mxu0
        %v1860 = vpop.f32.mrb[0].mxu0
        %v1861 = vadd.f32 %v1764, %v1860
        %v1862 = vpop.f32.mrb[0].mxu0
        %1863 = vmatprep.mubr.bf16.mxu0 0
        %1864 = vmatmul.mubr.bf16.gmra.mrb[0].mxu0 %v1504
        %v1865 = vpop.f32.mrb[0].mxu0
        %v1866 = vadd.f32 %v1769, %v1865
        %v1867 = vpop.f32.mrb[0].mxu0
        %v1868 = vpop.f32.mrb[0].mxu0
        %v1869 = vadd.f32 %v1772, %v1868
        %v1870 = vpop.f32.mrb[0].mxu0
        %1871 = vmatprep.mubr.bf16.mxu0 0
        %1872 = vmatmul.mubr.bf16.gmra.mrb[0].mxu0 %v1507
        %v1873 = vpop.f32.mrb[0].mxu0
        %v1874 = vadd.f32 %v1777, %v1873
        %v1875 = vpop.f32.mrb[0].mxu0
        %v1876 = vpop.f32.mrb[0].mxu0
        %v1877 = vadd.f32 %v1780, %v1876
        %v1878 = vpop.f32.mrb[0].mxu0
        %1879 = vmatprep.mubr.bf16.mxu0 0
        %1880 = vmatmul.mubr.bf16.gmra.mrb[0].mxu0 %v1510
        %v1881 = vpop.f32.mrb[0].mxu0
        %v1882 = vadd.f32 %v1785, %v1881
        %v1883 = vpop.f32.mrb[0].mxu0
        %v1884 = vpop.f32.mrb[0].mxu0
        %v1885 = vadd.f32 %v1788, %v1884
        %v1886 = vpop.f32.mrb[0].mxu0
        %1887 = vmatprep.mubr.bf16.mxu0 0
        %1888 = vmatmul.mubr.bf16.gmra.mrb[0].mxu0 %v1513
        %v1889 = vpop.f32.mrb[0].mxu0
        %v1890 = vadd.f32 %v1793, %v1889
        %v1891 = vpop.f32.mrb[0].mxu0
        %v1892 = vpop.f32.mrb[0].mxu0
        %v1893 = vadd.f32 %v1796, %v1892
        %v1894 = vpop.f32.mrb[0].mxu0
        %1895 = vmatprep.mubr.bf16.mxu0 0
        %1896 = vmatmul.mubr.bf16.gmra.mrb[0].mxu0 %v1516
        %v1897 = vpop.f32.mrb[0].mxu0
        %v1898 = vadd.f32 %v1801, %v1897
        %v1899 = vpop.f32.mrb[0].mxu0
        %v1900 = vpop.f32.mrb[0].mxu0
        %v1901 = vadd.f32 %v1804, %v1900
        %v1902 = vpop.f32.mrb[0].mxu0
        %1903 = vmatprep.mubr.bf16.mxu0 0
        %1904 = vmatmul.mubr.bf16.gmra.mrb[0].mxu0 %v1519
        %v1905 = vpop.f32.mrb[0].mxu0
        %v1906 = vadd.f32 %v1809, %v1905
        %v1907 = vpop.f32.mrb[0].mxu0
        %v1908 = vpop.f32.mrb[0].mxu0
        %v1909 = vadd.f32 %v1812, %v1908
        %v1910 = vpop.f32.mrb[0].mxu0
        %1911 = vmatprep.mubr.bf16.mxu0 0
        %1912 = vmatmul.mubr.bf16.gmra.mrb[0].mxu0 %v1522
        %v1913 = vpop.f32.mrb[0].mxu0
        %v1914 = vadd.f32 %v1817, %v1913
        %v1915 = vpop.f32.mrb[0].mxu0
        %v1916 = vpop.f32.mrb[0].mxu0
        %v1917 = vadd.f32 %v1820, %v1916
        %v1918 = vpop.f32.mrb[0].mxu0
        %1919 = vdwg.mxu0
        %v1920 = vld [vmem:[#allocation2] sm:$0xff]
        %v1921 = vld [vmem:[#allocation2 + $0x8] sm:$0xff]
        %v1922 = vld [vmem:[#allocation2 + $0x10] sm:$0xff]
        %v1923 = vld [vmem:[#allocation2 + $0x18] sm:$0xff]
        %v1924 = vld [vmem:[#allocation2 + $0x20] sm:$0xff]
        %v1925 = vld [vmem:[#allocation2 + $0x28] sm:$0xff]
        %v1926 = vld [vmem:[#allocation2 + $0x30] sm:$0xff]
        %v1927 = vld [vmem:[#allocation2 + $0x38] sm:$0xff]
        %v1928 = vld [vmem:[#allocation2 + $0x40] sm:$0xff]
        %v1929 = vld [vmem:[#allocation2 + $0x48] sm:$0xff]
        %v1930 = vld [vmem:[#allocation2 + $0x50] sm:$0xff]
        %v1931 = vld [vmem:[#allocation2 + $0x58] sm:$0xff]
        %v1932 = vld [vmem:[#allocation2 + $0x60] sm:$0xff]
        %v1933 = vld [vmem:[#allocation2 + $0x68] sm:$0xff]
        %v1934 = vld [vmem:[#allocation2 + $0x70] sm:$0xff]
        %v1935 = vld [vmem:[#allocation2 + $0x78] sm:$0xff]
        %v1936 = vadd.f32 %v1920, %v1858
        %v1937 = vadd.f32 %v1921, %v1861
        %v1938 = vadd.f32 %v1922, %v1866
        %v1939 = vadd.f32 %v1923, %v1869
        %v1940 = vadd.f32 %v1924, %v1874
        %v1941 = vadd.f32 %v1925, %v1877
        %v1942 = vadd.f32 %v1926, %v1882
        %v1943 = vadd.f32 %v1927, %v1885
        %v1944 = vadd.f32 %v1928, %v1890
        %v1945 = vadd.f32 %v1929, %v1893
        %v1946 = vadd.f32 %v1930, %v1898
        %v1947 = vadd.f32 %v1931, %v1901
        %v1948 = vadd.f32 %v1932, %v1906
        %v1949 = vadd.f32 %v1933, %v1909
        %v1950 = vadd.f32 %v1934, %v1914
        %v1951 = vadd.f32 %v1935, %v1917
        %1952 = vst [vmem:[#allocation2] sm:$0xff] %v1936
        %1953 = vst [vmem:[#allocation2 + $0x8] sm:$0xff] %v1937
        %1954 = vst [vmem:[#allocation2 + $0x10] sm:$0xff] %v1938
        %1955 = vst [vmem:[#allocation2 + $0x18] sm:$0xff] %v1939
        %1956 = vst [vmem:[#allocation2 + $0x20] sm:$0xff] %v1940
        %1957 = vst [vmem:[#allocation2 + $0x28] sm:$0xff] %v1941
        %1958 = vst [vmem:[#allocation2 + $0x30] sm:$0xff] %v1942
        %1959 = vst [vmem:[#allocation2 + $0x38] sm:$0xff] %v1943
        %1960 = vst [vmem:[#allocation2 + $0x40] sm:$0xff] %v1944
        %1961 = vst [vmem:[#allocation2 + $0x48] sm:$0xff] %v1945
        %1962 = vst [vmem:[#allocation2 + $0x50] sm:$0xff] %v1946
        %1963 = vst [vmem:[#allocation2 + $0x58] sm:$0xff] %v1947
        %1964 = vst [vmem:[#allocation2 + $0x60] sm:$0xff] %v1948
        %1965 = vst [vmem:[#allocation2 + $0x68] sm:$0xff] %v1949
        %1966 = vst [vmem:[#allocation2 + $0x70] sm:$0xff] %v1950
        %1967 = vst [vmem:[#allocation2 + $0x78] sm:$0xff] %v1951
        %v1968 = vld [vmem:[#allocation2] sm:$0xff]
        %v1969 = vld [vmem:[#allocation2 + $0x8] sm:$0xff]
        %v1970 = vld [vmem:[#allocation2 + $0x10] sm:$0xff]
        %v1971 = vld [vmem:[#allocation2 + $0x18] sm:$0xff]
        %v1972 = vld [vmem:[#allocation2 + $0x20] sm:$0xff]
        %v1973 = vld [vmem:[#allocation2 + $0x28] sm:$0xff]
        %v1974 = vld [vmem:[#allocation2 + $0x30] sm:$0xff]
        %v1975 = vld [vmem:[#allocation2 + $0x38] sm:$0xff]
        %v1976 = vld [vmem:[#allocation2 + $0x40] sm:$0xff]
        %v1977 = vld [vmem:[#allocation2 + $0x48] sm:$0xff]
        %v1978 = vld [vmem:[#allocation2 + $0x50] sm:$0xff]
        %v1979 = vld [vmem:[#allocation2 + $0x58] sm:$0xff]
        %v1980 = vld [vmem:[#allocation2 + $0x60] sm:$0xff]
        %v1981 = vld [vmem:[#allocation2 + $0x68] sm:$0xff]
        %v1982 = vld [vmem:[#allocation2 + $0x70] sm:$0xff]
        %v1983 = vld [vmem:[#allocation2 + $0x78] sm:$0xff]
        %v1984 = vld [vmem:[%s2] sm:$0x1]
        %v1986 = vlaneseq
        %v1987 = vshrl.u32 %v1986, 7
        %v1988 = vsub.s32 0, %v1987
        %v1989 = vrot.slane %v1984, %v1988
        %v1991 = vadd.f32 %v1968, %v1989
        %v1992 = vadd.f32 %v1969, %v1989
        %v1993 = vadd.f32 %v1970, %v1989
        %v1994 = vadd.f32 %v1971, %v1989
        %v1995 = vadd.f32 %v1972, %v1989
        %v1996 = vadd.f32 %v1973, %v1989
        %v1997 = vadd.f32 %v1974, %v1989
        %v1998 = vadd.f32 %v1975, %v1989
        %v1999 = vadd.f32 %v1976, %v1989
        %v2000 = vadd.f32 %v1977, %v1989
        %v2001 = vadd.f32 %v1978, %v1989
        %v2002 = vadd.f32 %v1979, %v1989
        %v2003 = vadd.f32 %v1980, %v1989
        %v2004 = vadd.f32 %v1981, %v1989
        %v2005 = vadd.f32 %v1982, %v1989
        %v2006 = vadd.f32 %v1983, %v1989
        %v2007 = vxor.u32 %v1991, 2147483648
        %v2008 = vxor.u32 %v1992, 2147483648
        %v2009 = vxor.u32 %v1993, 2147483648
        %v2010 = vxor.u32 %v1994, 2147483648
        %v2011 = vxor.u32 %v1995, 2147483648
        %v2012 = vxor.u32 %v1996, 2147483648
        %v2013 = vxor.u32 %v1997, 2147483648
        %v2014 = vxor.u32 %v1998, 2147483648
        %v2015 = vxor.u32 %v1999, 2147483648
        %v2016 = vxor.u32 %v2000, 2147483648
        %v2017 = vxor.u32 %v2001, 2147483648
        %v2018 = vxor.u32 %v2002, 2147483648
        %v2019 = vxor.u32 %v2003, 2147483648
        %v2020 = vxor.u32 %v2004, 2147483648
        %v2021 = vxor.u32 %v2005, 2147483648
        %v2022 = vxor.u32 %v2006, 2147483648
        %v2023 = vmul.f32 %v2007, 1.442695
        %v2024 = vpow.pop %v2023
        %v2025 = vmul.f32 %v2008, 1.442695
        %v2026 = vpow.pop %v2025
        %v2027 = vmul.f32 %v2009, 1.442695
        %v2028 = vpow.pop %v2027
        %v2029 = vmul.f32 %v2010, 1.442695
        %v2030 = vpow.pop %v2029
        %v2031 = vmul.f32 %v2011, 1.442695
        %v2032 = vpow.pop %v2031
        %v2033 = vmul.f32 %v2012, 1.442695
        %v2034 = vpow.pop %v2033
        %v2035 = vmul.f32 %v2013, 1.442695
        %v2036 = vpow.pop %v2035
        %v2037 = vmul.f32 %v2014, 1.442695
        %v2038 = vpow.pop %v2037
        %v2039 = vmul.f32 %v2015, 1.442695
        %v2040 = vpow.pop %v2039
        %v2041 = vmul.f32 %v2016, 1.442695
        %v2042 = vpow.pop %v2041
        %v2043 = vmul.f32 %v2017, 1.442695
        %v2044 = vpow.pop %v2043
        %v2045 = vmul.f32 %v2018, 1.442695
        %v2046 = vpow.pop %v2045
        %v2047 = vmul.f32 %v2019, 1.442695
        %v2048 = vpow.pop %v2047
        %v2049 = vmul.f32 %v2020, 1.442695
        %v2050 = vpow.pop %v2049
        %v2051 = vmul.f32 %v2021, 1.442695
        %v2052 = vpow.pop %v2051
        %v2053 = vmul.f32 %v2022, 1.442695
        %v2054 = vpow.pop %v2053
        %v2055 = vadd.f32 %v2024, 1.0
        %v2056 = vadd.f32 %v2026, 1.0
        %v2057 = vadd.f32 %v2028, 1.0
        %v2058 = vadd.f32 %v2030, 1.0
        %v2059 = vadd.f32 %v2032, 1.0
        %v2060 = vadd.f32 %v2034, 1.0
        %v2061 = vadd.f32 %v2036, 1.0
        %v2062 = vadd.f32 %v2038, 1.0
        %v2063 = vadd.f32 %v2040, 1.0
        %v2064 = vadd.f32 %v2042, 1.0
        %v2065 = vadd.f32 %v2044, 1.0
        %v2066 = vadd.f32 %v2046, 1.0
        %v2067 = vadd.f32 %v2048, 1.0
        %v2068 = vadd.f32 %v2050, 1.0
        %v2069 = vadd.f32 %v2052, 1.0
        %v2070 = vadd.f32 %v2054, 1.0
        %v2071 = vrcp.pop %v2055
        %v2072 = vmul.f32 1.0, %v2071
        %v2073 = vrcp.pop %v2056
        %v2074 = vmul.f32 1.0, %v2073
        %v2075 = vrcp.pop %v2057
        %v2076 = vmul.f32 1.0, %v2075
        %v2077 = vrcp.pop %v2058
        %v2078 = vmul.f32 1.0, %v2077
        %v2079 = vrcp.pop %v2059
        %v2080 = vmul.f32 1.0, %v2079
        %v2081 = vrcp.pop %v2060
        %v2082 = vmul.f32 1.0, %v2081
        %v2083 = vrcp.pop %v2061
        %v2084 = vmul.f32 1.0, %v2083
        %v2085 = vrcp.pop %v2062
        %v2086 = vmul.f32 1.0, %v2085
        %v2087 = vrcp.pop %v2063
        %v2088 = vmul.f32 1.0, %v2087
        %v2089 = vrcp.pop %v2064
        %v2090 = vmul.f32 1.0, %v2089
        %v2091 = vrcp.pop %v2065
        %v2092 = vmul.f32 1.0, %v2091
        %v2093 = vrcp.pop %v2066
        %v2094 = vmul.f32 1.0, %v2093
        %v2095 = vrcp.pop %v2067
        %v2096 = vmul.f32 1.0, %v2095
        %v2097 = vrcp.pop %v2068
        %v2098 = vmul.f32 1.0, %v2097
        %v2099 = vrcp.pop %v2069
        %v2100 = vmul.f32 1.0, %v2099
        %v2101 = vrcp.pop %v2070
        %v2102 = vmul.f32 1.0, %v2101
        %v2103 = vmul.f32 %v1991, %v2072
        %v2104 = vmul.f32 %v1992, %v2074
        %v2105 = vmul.f32 %v1993, %v2076
        %v2106 = vmul.f32 %v1994, %v2078
        %v2107 = vmul.f32 %v1995, %v2080
        %v2108 = vmul.f32 %v1996, %v2082
        %v2109 = vmul.f32 %v1997, %v2084
        %v2110 = vmul.f32 %v1998, %v2086
        %v2111 = vmul.f32 %v1999, %v2088
        %v2112 = vmul.f32 %v2000, %v2090
        %v2113 = vmul.f32 %v2001, %v2092
        %v2114 = vmul.f32 %v2002, %v2094
        %v2115 = vmul.f32 %v2003, %v2096
        %v2116 = vmul.f32 %v2004, %v2098
        %v2117 = vmul.f32 %v2005, %v2100
        %v2118 = vmul.f32 %v2006, %v2102
        %2119 = vst [vmem:[%s221] sm:$0xff] %v2103
        %2120 = vst [vmem:[%s221 + $0x8] sm:$0xff] %v2104
        %2121 = vst [vmem:[%s221 + $0x10] sm:$0xff] %v2105
        %2122 = vst [vmem:[%s221 + $0x18] sm:$0xff] %v2106
        %2123 = vst [vmem:[%s221 + $0x20] sm:$0xff] %v2107
        %2124 = vst [vmem:[%s221 + $0x28] sm:$0xff] %v2108
        %2125 = vst [vmem:[%s221 + $0x30] sm:$0xff] %v2109
        %2126 = vst [vmem:[%s221 + $0x38] sm:$0xff] %v2110
        %2127 = vst [vmem:[%s221 + $0x40] sm:$0xff] %v2111
        %2128 = vst [vmem:[%s221 + $0x48] sm:$0xff] %v2112
        %2129 = vst [vmem:[%s221 + $0x50] sm:$0xff] %v2113
        %2130 = vst [vmem:[%s221 + $0x58] sm:$0xff] %v2114
        %2131 = vst [vmem:[%s221 + $0x60] sm:$0xff] %v2115
        %2132 = vst [vmem:[%s221 + $0x68] sm:$0xff] %v2116
        %2133 = vst [vmem:[%s221 + $0x70] sm:$0xff] %v2117
        %2134 = vst [vmem:[%s221 + $0x78] sm:$0xff] %v2118
        %s2135 = sand.u32 %s113, 1
        %s2136 = scalar_lea.sflag [#allocation5], %s2135
        %s2137 = sand.u32 %s113, 1
        %s2138 = smul.addr %s2137, 128
        %s2139 = scalar_lea.vmem [#allocation8], %s2138
        // Predicated region
        $region41: #{tpu_custom_call.1} parent=31 // pred_check
          %p2140 = pneg %p123
        $region42: #{tpu_custom_call.1} parent=31 // pred_check_branch
          %2142 = sbr.rel (%p2140) target = $region44
        $region43: #{tpu_custom_call.1} parent=31 // pred_region
          %s2143 = smul.u32 8, %s26
          %s2145 = ssub.s32 2048, 2048
          %2146 = vsyncadd %s2136, %s2145
          %s2147 = smul.addr %s2143, 2
          %s2148 = smul.addr %s25, 32
          %s2149 = sadd.s32 %s2147, %s2148
          %s2150 = smul.addr %s2149, 128
          %s2151 = scalar_lea.hbm %s3, %s2150
          %s2152 = sshll.u32 %s2139, 4
          %s2153 = int_to_ptr.vmem [resolvable:$true] %s2152
          %2158 = dma.vmem_to_hbm [thread:$0]  %s2153, 2048, %s2151, %s2136, 128, 128, 8
        $region44: #{tpu_custom_call.1} parent=31 // pred_fallthru
          _
      $region32: #{tpu_custom_call.1} parent=5 // pred_fallthru
        _
      %p2159 = scmp.le.s32.totalorder 2, %s16
      // Predicated region
      $region45: #{tpu_custom_call.1} parent=5 // pred_check
        %p2160 = pneg %p2159
      $region46: #{tpu_custom_call.1} parent=5 // pred_check_branch
        %2162 = sbr.rel (%p2160) target = $region48
      $region47: #{tpu_custom_call.1} parent=5 // pred_region
        %s2163 = ssub.s32 %s16, 2
        // Predicated region
        $region49: #{tpu_custom_call.1} parent=47 // pred_check
          %p2164 = pneg %p129
        $region50: #{tpu_custom_call.1} parent=47 // pred_check_branch
          %2166 = sbr.rel (%p2164) target = $region52
        $region51: #{tpu_custom_call.1} parent=47 // pred_region
          %s2167 = sand.u32 %s114, 1
          %s2168 = scalar_lea.sflag [#allocation5], %s2167
          %s2169 = sand.u32 %s114, 1
          %s2170 = smul.addr %s2169, 128
          %s2171 = scalar_lea.vmem [#allocation8], %s2170
          %2172 = dma.done %s2168, 2048
        $region52: #{tpu_custom_call.1} parent=47 // pred_fallthru
          _
      $region48: #{tpu_custom_call.1} parent=5 // pred_fallthru
        _
    $region6: #{tpu_custom_call.1} parent=1 // loop_footer
      %s20 = sadd.s32 1, %s16
    $region7: #{tpu_custom_call.1} parent=1 // loop_footer_branch
      %15 = sbr.rel target = $region3
    $region8: #{tpu_custom_call.1} parent=1 // loop_exit
      _
    %2173 = vsyncpa [#allocation4], 1
    %s2174 = scalar_lea.sflag [#allocation4], 1
    %2175 = vsyncpa %s2174, 1
    %2176 = vsyncpa [#allocation7], 1
    %2177 = vsyncpa [#allocation5], 1
    %s2178 = scalar_lea.sflag [#allocation5], 1
    %2179 = vsyncpa %s2178, 1

</llo_original>
